<compile_context>
chip_gen: v7x
topology: tpu7x:2x2x1
jax: 0.10.0
libtpu: 0.0.40
codegen_flags: <defaults>
</compile_context>

<pallas_src>
import functools

import jax
import jax.numpy as jnp
from jax.experimental import pallas as pl
from jax.experimental.pallas import tpu as pltpu

EPS = 1e-5
NEG_INF = -1e9


def _layernorm(x, g, b):
    mu = jnp.mean(x, axis=-1, keepdims=True)
    var = jnp.mean((x - mu) ** 2, axis=-1, keepdims=True)
    return (x - mu) * jax.lax.rsqrt(var + EPS) * g + b


# ---------------------------------------------------------------------------
# Fused Pallas kernel: all layers + final LayerNorm, grid = (B, L)
# ---------------------------------------------------------------------------
def encoder_stack_kernel(x_ref, mask_ref,
                         wqkv_ref, bqkv_ref, wo_ref,
                         w1_ref, b1_ref, w2_ref, smallc_ref,
                         fg_ref, fb_ref,
                         out_ref, x_sc,
                         *, num_heads, use_final_ln):
    l = pl.program_id(1)
    n_layers = pl.num_programs(1)

    # Load the activation into the VMEM carry on the first layer step only.
    @pl.when(l == 0)
    def _():
        x_sc[...] = x_ref[0]

    x = x_sc[...]                      # (T, C) f32, carried across the L axis
    add_mask = mask_ref[0]             # (1, T) additive key-padding mask
    T, C = x.shape
    H = num_heads
    d = C // H

    small = smallc_ref[0]              # (6, C): ln1_g, ln1_b, bo, ln2_g, ln2_b, b2
    ln1_g, ln1_b = small[0:1, :], small[1:2, :]
    bo = small[2:3, :]
    ln2_g, ln2_b = small[3:4, :], small[4:5, :]
    b2 = small[5:6, :]

    # ---------------- self-attention (pre-LN), heads batched on the MXU -----
    residual = x
    h = _layernorm(x, ln1_g, ln1_b).astype(jnp.bfloat16)            # (T, C)
    hb = jnp.broadcast_to(h[None], (H, T, C))                       # (H, T, C)
    qkv = jax.lax.dot_general(                                      # (H, T, 3d)
        hb, wqkv_ref[0],
        dimension_numbers=(((2,), (1,)), ((0,), (0,))),
        preferred_element_type=jnp.float32) + bqkv_ref[0]
    q = qkv[..., 0:d].astype(jnp.bfloat16)       # 1/sqrt(d) folded into wq/bq
    k = qkv[..., d:2 * d].astype(jnp.bfloat16)
    v = qkv[..., 2 * d:3 * d].astype(jnp.bfloat16)

    s = jax.lax.dot_general(                                        # (H, T, T)
        q, k, dimension_numbers=(((2,), (2,)), ((0,), (0,))),
        preferred_element_type=jnp.float32)
    s = s + add_mask[None, :, :]
    s = s - jnp.max(s, axis=-1, keepdims=True)
    p = jnp.exp(s)
    p = p * pl.reciprocal(jnp.sum(p, axis=-1, keepdims=True), approx=True)

    o = jax.lax.dot_general(                                        # (H, T, d)
        p.astype(jnp.bfloat16), v,
        dimension_numbers=(((2,), (1,)), ((0,), (0,))),
        preferred_element_type=jnp.float32)
    attn_h = jax.lax.dot_general(                                   # (H, T, C)
        o.astype(jnp.bfloat16), wo_ref[0],
        dimension_numbers=(((2,), (1,)), ((0,), (0,))),
        preferred_element_type=jnp.float32)
    attn = jnp.sum(attn_h, axis=0) + bo                             # (T, C)
    x = residual + attn

    # ---------------- feed-forward (pre-LN), ReLU ----------------------------
    residual = x
    h = _layernorm(x, ln2_g, ln2_b).astype(jnp.bfloat16)
    hid = jnp.dot(h, w1_ref[0], preferred_element_type=jnp.float32) + b1_ref[0]
    hid = jnp.maximum(hid, 0.0).astype(jnp.bfloat16)
    ffn = jnp.dot(hid, w2_ref[0], preferred_element_type=jnp.float32) + b2
    x = residual + ffn

    x_sc[...] = x

    # Final LayerNorm + writeback only on the last layer step.
    @pl.when(l == n_layers - 1)
    def _():
        y = x
        if use_final_ln:
            y = _layernorm(y, fg_ref[...], fb_ref[...])
        out_ref[0] = y.astype(out_ref.dtype)


# ---------------------------------------------------------------------------
# Parameter preparation: stack layers, head-major weights, bf16, scale folding
# ---------------------------------------------------------------------------
def prepare_params(params, num_heads):
    layers = params['layers']
    C = layers[0]['wq'].shape[0]
    H = num_heads
    assert C % H == 0
    d = C // H
    scale = d ** -0.5

    def per_head_qkv(wq, wk, wv):
        # (C, C) each -> (H, C, 3d), softmax scale folded into the q slice
        wq = (wq * scale).reshape(C, H, d).transpose(1, 0, 2)   # (H, C, d)
        wk = wk.reshape(C, H, d).transpose(1, 0, 2)
        wv = wv.reshape(C, H, d).transpose(1, 0, 2)
        return jnp.concatenate([wq, wk, wv], axis=-1)            # (H, C, 3d)

    def per_head_qkv_bias(bq, bk, bv):
        bq = (bq * scale).reshape(H, 1, d)
        bk = bk.reshape(H, 1, d)
        bv = bv.reshape(H, 1, d)
        return jnp.concatenate([bq, bk, bv], axis=-1)            # (H, 1, 3d)

    w_qkv, b_qkv, w_o, w1s, w2s, b1s, small_c = [], [], [], [], [], [], []
    for lp in layers:
        w_qkv.append(per_head_qkv(lp['wq'], lp['wk'], lp['wv']))
        b_qkv.append(per_head_qkv_bias(lp['bq'], lp['bk'], lp['bv']))
        w_o.append(lp['wo'].reshape(H, d, C))                    # (H, d, C)
        w1s.append(lp['w1'])
        w2s.append(lp['w2'])
        b1s.append(lp['b1'])
        small_c.append(jnp.concatenate(
            [lp['ln1_g'], lp['ln1_b'], lp['bo'],
             lp['ln2_g'], lp['ln2_b'], lp['b2']], axis=0))       # (6, C)

    prep = dict(
        w_qkv=jnp.stack(w_qkv).astype(jnp.bfloat16),     # (L, H, C, 3d)
        b_qkv=jnp.stack(b_qkv).astype(jnp.float32),      # (L, H, 1, 3d)
        w_o=jnp.stack(w_o).astype(jnp.bfloat16),         # (L, H, d, C)
        w1=jnp.stack(w1s).astype(jnp.bfloat16),          # (L, C, F)
        w2=jnp.stack(w2s).astype(jnp.bfloat16),          # (L, F, C)
        b1=jnp.stack(b1s).astype(jnp.float32),           # (L, 1, F)
        small_c=jnp.stack(small_c).astype(jnp.float32),  # (L, 6, C)
    )
    if params['final_ln'] is not None:
        fg, fb = params['final_ln']
        prep['use_final_ln'] = True
    else:
        fg = jnp.ones((1, C), jnp.float32)
        fb = jnp.zeros((1, C), jnp.float32)
        prep['use_final_ln'] = False
    prep['final_g'] = fg.astype(jnp.float32)
    prep['final_b'] = fb.astype(jnp.float32)
    return prep


def _vmem_limit_bytes(T, C, F, H):
    d = C // H
    bf, f32 = 2, 4
    weights = 2 * bf * (H * C * 3 * d + H * d * C + C * F + F * C)   # double-buffered
    smalls = 2 * f32 * (H * 3 * d + F + 6 * C + 2 * C + T * C + T)
    acts = f32 * (8 * T * C + 3 * H * T * 3 * d + 3 * H * T * T
                  + 2 * T * F + H * T * C)
    total = weights + smalls + acts + (2 << 20)
    return int(min(max(2 * total, 8 << 20), 64 << 20))


# ---------------------------------------------------------------------------
# Wrapper: one pallas_call for the whole encoder stack
# ---------------------------------------------------------------------------
def self_att_encoder(embedding, padding_mask, params, num_heads):
    """Pallas equivalent of SelfATTEncoder.forward (return_all_hiddens=False).

    embedding:    (B, T, C) float32
    padding_mask: (B, T) bool, True = pad
    returns (encoder_out (T,B,C), encoder_padding_mask, encoder_embedding)
    """
    B, T, C = embedding.shape
    H = num_heads
    d = C // H
    prep = prepare_params(params, num_heads)
    L = prep['w_qkv'].shape[0]
    F = prep['w1'].shape[-1]

    x = embedding.astype(jnp.float32)
    add_mask = jnp.where(padding_mask, NEG_INF, 0.0).astype(jnp.float32)
    add_mask = add_mask.reshape(B, 1, T)

    kernel = functools.partial(encoder_stack_kernel, num_heads=H,
                               use_final_ln=prep['use_final_ln'])

    in_specs = [
        pl.BlockSpec((1, T, C), lambda b, l: (b, 0, 0)),            # x (f32)
        pl.BlockSpec((1, 1, T), lambda b, l: (b, 0, 0)),            # additive mask
        pl.BlockSpec((1, H, C, 3 * d), lambda b, l: (l, 0, 0, 0)),  # w_qkv (bf16)
        pl.BlockSpec((1, H, 1, 3 * d), lambda b, l: (l, 0, 0, 0)),  # b_qkv (f32)
        pl.BlockSpec((1, H, d, C), lambda b, l: (l, 0, 0, 0)),      # w_o (bf16)
        pl.BlockSpec((1, C, F), lambda b, l: (l, 0, 0)),            # w1 (bf16)
        pl.BlockSpec((1, 1, F), lambda b, l: (l, 0, 0)),            # b1 (f32)
        pl.BlockSpec((1, F, C), lambda b, l: (l, 0, 0)),            # w2 (bf16)
        pl.BlockSpec((1, 6, C), lambda b, l: (l, 0, 0)),            # packed small params
        pl.BlockSpec((1, C), lambda b, l: (0, 0)),                  # final LN gamma
        pl.BlockSpec((1, C), lambda b, l: (0, 0)),                  # final LN beta
    ]
    out_spec = pl.BlockSpec((1, T, C), lambda b, l: (b, 0, 0))

    out = pl.pallas_call(
        kernel,
        out_shape=jax.ShapeDtypeStruct((B, T, C), jnp.float32),
        grid=(B, L),
        in_specs=in_specs,
        out_specs=out_spec,
        scratch_shapes=[pltpu.VMEM((T, C), jnp.float32)],
        compiler_params=pltpu.CompilerParams(
            dimension_semantics=("parallel", "arbitrary"),
            vmem_limit_bytes=_vmem_limit_bytes(T, C, F, H)),
    )(x, add_mask, prep['w_qkv'], prep['b_qkv'], prep['w_o'],
      prep['w1'], prep['b1'], prep['w2'], prep['small_c'],
      prep['final_g'], prep['final_b'])

    encoder_out = jnp.transpose(out, (1, 0, 2))  # (T, B, C), fairseq convention
    # TODO(synk): return_all_hiddens / EncoderOut namedtuple are pure Python
    # glue; a plain tuple of the meaningful fields is returned instead.
    # TODO(synk): for long sequences (T >= ~2k) the attention should be query-
    # tiled with an online softmax; full (H,T,T) scores are fine at these sizes.
    return encoder_out, padding_mask, embedding


# ---------------------------------------------------------------------------
# Deterministic parameter init (synthetic, no checkpoint)
# ---------------------------------------------------------------------------
def init_params(key, num_layers, C, F, normalize_before=True):
    layers = []
    for _ in range(num_layers):
        key, *ks = jax.random.split(key, 7)

        def w(k, shape, scale=0.05):
            return (scale * jax.random.normal(k, shape)).astype(jnp.float32)

        layers.append(dict(
            ln1_g=jnp.ones((1, C), jnp.float32), ln1_b=jnp.zeros((1, C), jnp.float32),
            wq=w(ks[0], (C, C)), bq=jnp.zeros((1, C), jnp.float32),
            wk=w(ks[1], (C, C)), bk=jnp.zeros((1, C), jnp.float32),
            wv=w(ks[2], (C, C)), bv=jnp.zeros((1, C), jnp.float32),
            wo=w(ks[3], (C, C)), bo=jnp.zeros((1, C), jnp.float32),
            ln2_g=jnp.ones((1, C), jnp.float32), ln2_b=jnp.zeros((1, C), jnp.float32),
            w1=w(ks[4], (C, F)), b1=jnp.zeros((1, F), jnp.float32),
            w2=w(ks[5], (F, C)), b2=jnp.zeros((1, C), jnp.float32),
        ))
    final_ln = None
    if normalize_before:
        final_ln = (jnp.ones((1, C), jnp.float32), jnp.zeros((1, C), jnp.float32))
    return dict(layers=layers, final_ln=final_ln)


# ---------------------------------------------------------------------------
# Pure-JAX reference (f32, for correctness check)
# ---------------------------------------------------------------------------
def ref_forward(embedding, padding_mask, params, num_heads):
    x = embedding.astype(jnp.float32)
    B, T, C = x.shape
    d = C // num_heads
    add_mask = jnp.where(padding_mask, NEG_INF, 0.0)[:, None, None, :]

    def ln(x, g, b):
        mu = x.mean(-1, keepdims=True)
        var = ((x - mu) ** 2).mean(-1, keepdims=True)
        return (x - mu) / jnp.sqrt(var + EPS) * g + b

    for lp in params['layers']:
        res = x
        h = ln(x, lp['ln1_g'], lp['ln1_b'])
        q = (h @ lp['wq'] + lp['bq']).reshape(B, T, num_heads, d).transpose(0, 2, 1, 3)
        k = (h @ lp['wk'] + lp['bk']).reshape(B, T, num_heads, d).transpose(0, 2, 1, 3)
        v = (h @ lp['wv'] + lp['bv']).reshape(B, T, num_heads, d).transpose(0, 2, 1, 3)
        s = jnp.einsum('bhqd,bhkd->bhqk', q * d ** -0.5, k) + add_mask
        p = jax.nn.softmax(s, axis=-1)
        o = jnp.einsum('bhqk,bhkd->bhqd', p, v).transpose(0, 2, 1, 3).reshape(B, T, C)
        x = res + o @ lp['wo'] + lp['bo']
        res = x
        h = ln(x, lp['ln2_g'], lp['ln2_b'])
        x = res + jnp.maximum(h @ lp['w1'] + lp['b1'], 0.0) @ lp['w2'] + lp['b2']
    if params['final_ln'] is not None:
        x = ln(x, *params['final_ln'])
    return jnp.transpose(x, (1, 0, 2))


if __name__ == "__main__":
    B, T, C, H, F, L = 2, 8, 32, 4, 64, 2   # batch, seq, embed, heads, ffn, latent_layers
    key = jax.random.PRNGKey(0)
    kx, kp = jax.random.split(key)
    embedding = jax.random.normal(kx, (B, T, C), jnp.float32)
    lengths = jnp.array([T, T - 3])
    padding_mask = jnp.arange(T)[None, :] >= lengths[:, None]   # (B, T), True = pad

    params = init_params(kp, L, C, F, normalize_before=True)

    enc_out, enc_pad, enc_emb = self_att_encoder(embedding, padding_mask, params, H)
    enc_out = jax.block_until_ready(enc_out)

    assert enc_out.shape == (T, B, C)
    ref = ref_forward(embedding, padding_mask, params, H)
    max_err = float(jnp.max(jnp.abs(enc_out - ref)))
    # bf16 MXU inputs + approximate reciprocal -> looser tolerance than pure f32
    assert max_err < 5e-2, f"mismatch vs reference: {max_err}"
    print("KERNEL_OK")
</pallas_src>

<mosaic_0001>
module attributes {stable_mosaic.version = 11 : i64} {
  func.func @encoder_stack_kernel(%arg0: i32, %arg1: i32, %arg2: memref<1x8x32xf32, #tpu.memory_space<vmem>>, %arg3: memref<1x1x8xf32, #tpu.memory_space<vmem>>, %arg4: memref<1x4x32x24xbf16, #tpu.memory_space<vmem>>, %arg5: memref<1x4x1x24xf32, #tpu.memory_space<vmem>>, %arg6: memref<1x4x8x32xbf16, #tpu.memory_space<vmem>>, %arg7: memref<1x32x64xbf16, #tpu.memory_space<vmem>>, %arg8: memref<1x1x64xf32, #tpu.memory_space<vmem>>, %arg9: memref<1x64x32xbf16, #tpu.memory_space<vmem>>, %arg10: memref<1x6x32xf32, #tpu.memory_space<vmem>>, %arg11: memref<1x32xf32, #tpu.memory_space<vmem>>, %arg12: memref<1x32xf32, #tpu.memory_space<vmem>>, %arg13: memref<1x8x32xf32, #tpu.memory_space<vmem>>, %arg14: memref<8x32xf32, #tpu.memory_space<vmem>>) attributes {dimension_semantics = [#tpu.dimension_semantics<parallel>, #tpu.dimension_semantics<arbitrary>], iteration_bounds = array<i64: 2, 2>, scalar_prefetch = 0 : i64, scratch_operands = 1 : i64, tpu.core_type = #tpu.core_type<tc>, window_params = [{transform_indices = @transform_0, window_bounds = array<i64: 1, 8, 32>}, {transform_indices = @transform_1, window_bounds = array<i64: 1, 1, 8>}, {transform_indices = @transform_2, window_bounds = array<i64: 1, 4, 32, 24>}, {transform_indices = @transform_3, window_bounds = array<i64: 1, 4, 1, 24>}, {transform_indices = @transform_4, window_bounds = array<i64: 1, 4, 8, 32>}, {transform_indices = @transform_5, window_bounds = array<i64: 1, 32, 64>}, {transform_indices = @transform_6, window_bounds = array<i64: 1, 1, 64>}, {transform_indices = @transform_7, window_bounds = array<i64: 1, 64, 32>}, {transform_indices = @transform_8, window_bounds = array<i64: 1, 6, 32>}, {pipeline_mode = #tpu.pipeline_mode<synchronous>, transform_indices = @transform_9, window_bounds = array<i64: 1, 32>}, {pipeline_mode = #tpu.pipeline_mode<synchronous>, transform_indices = @transform_10, window_bounds = array<i64: 1, 32>}, {transform_indices = @transform_11, window_bounds = array<i64: 1, 8, 32>}]} {
    %c0_i32 = arith.constant 0 : i32
    %0 = arith.cmpi eq, %arg1, %c0_i32 : i32
    %1 = arith.extui %0 : i1 to i32
    %c0_i32_0 = arith.constant 0 : i32
    %2 = arith.cmpi ne, %1, %c0_i32_0 : i32
    scf.if %2 {
      %c0_51 = arith.constant 0 : index
      %c0_52 = arith.constant 0 : index
      %c0_53 = arith.constant 0 : index
      %120 = vector.load %arg2[%c0_51, %c0_52, %c0_53] : memref<1x8x32xf32, #tpu.memory_space<vmem>>, vector<1x8x32xf32>
      %121 = vector.shape_cast %120 : vector<1x8x32xf32> to vector<8x32xf32>
      %c0_54 = arith.constant 0 : index
      %c0_55 = arith.constant 0 : index
      %122 = vector.load %arg14[%c0_54, %c0_55] : memref<8x32xf32, #tpu.memory_space<vmem>>, vector<8x32xf32>
      tpu.vector_store %arg14[%c0_54, %c0_55], %121 {strides = array<i32>} : memref<8x32xf32, #tpu.memory_space<vmem>>, vector<8x32xf32>,
    } else {
    }
    %c0 = arith.constant 0 : index
    %c0_1 = arith.constant 0 : index
    %3 = vector.load %arg14[%c0, %c0_1] : memref<8x32xf32, #tpu.memory_space<vmem>>, vector<8x32xf32>
    %c0_2 = arith.constant 0 : index
    %c0_3 = arith.constant 0 : index
    %c0_4 = arith.constant 0 : index
    %4 = vector.load %arg3[%c0_2, %c0_3, %c0_4] : memref<1x1x8xf32, #tpu.memory_space<vmem>>, vector<1x1x8xf32>
    %5 = vector.shape_cast %4 : vector<1x1x8xf32> to vector<1x8xf32>
    %c0_5 = arith.constant 0 : index
    %c0_6 = arith.constant 0 : index
    %c0_7 = arith.constant 0 : index
    %6 = vector.load %arg10[%c0_5, %c0_6, %c0_7] : memref<1x6x32xf32, #tpu.memory_space<vmem>>, vector<1x6x32xf32>
    %7 = vector.shape_cast %6 : vector<1x6x32xf32> to vector<6x32xf32>
    %8 = vector.extract_strided_slice %7 {offsets = [0, 0], sizes = [1, 32], strides = [1, 1]} : vector<6x32xf32> to vector<1x32xf32>
    %9 = vector.extract_strided_slice %7 {offsets = [1, 0], sizes = [1, 32], strides = [1, 1]} : vector<6x32xf32> to vector<1x32xf32>
    %10 = vector.extract_strided_slice %7 {offsets = [2, 0], sizes = [1, 32], strides = [1, 1]} : vector<6x32xf32> to vector<1x32xf32>
    %11 = vector.extract_strided_slice %7 {offsets = [3, 0], sizes = [1, 32], strides = [1, 1]} : vector<6x32xf32> to vector<1x32xf32>
    %12 = vector.extract_strided_slice %7 {offsets = [4, 0], sizes = [1, 32], strides = [1, 1]} : vector<6x32xf32> to vector<1x32xf32>
    %13 = vector.extract_strided_slice %7 {offsets = [5, 0], sizes = [1, 32], strides = [1, 1]} : vector<6x32xf32> to vector<1x32xf32>
    %cst = arith.constant dense<0.000000e+00> : vector<8xf32>
    %14 = vector.multi_reduction <add>, %3, %cst [1] : vector<8x32xf32> to vector<8xf32>
    %15 = vector.shape_cast %14 : vector<8xf32> to vector<8x1xf32>
    %cst_8 = arith.constant 3.200000e+01 : f32
    %16 = vector.broadcast %cst_8 : f32 to vector<8x1xf32>
    %17 = arith.divf %15, %16 : vector<8x1xf32>
    %18 = vector.broadcast %17 : vector<8x1xf32> to vector<8x32xf32>
    %19 = arith.subf %3, %18 : vector<8x32xf32>
    %20 = arith.mulf %19, %19 : vector<8x32xf32>
    %cst_9 = arith.constant dense<0.000000e+00> : vector<8xf32>
    %21 = vector.multi_reduction <add>, %20, %cst_9 [1] : vector<8x32xf32> to vector<8xf32>
    %22 = vector.shape_cast %21 : vector<8xf32> to vector<8x1xf32>
    %cst_10 = arith.constant 3.200000e+01 : f32
    %23 = vector.broadcast %cst_10 : f32 to vector<8x1xf32>
    %24 = arith.divf %22, %23 : vector<8x1xf32>
    %25 = vector.broadcast %17 : vector<8x1xf32> to vector<8x32xf32>
    %26 = arith.subf %3, %25 : vector<8x32xf32>
    %cst_11 = arith.constant 9.99999974E-6 : f32
    %27 = vector.broadcast %cst_11 : f32 to vector<8x1xf32>
    %28 = arith.addf %24, %27 : vector<8x1xf32>
    %29 = math.rsqrt %28 : vector<8x1xf32>
    %30 = vector.broadcast %29 : vector<8x1xf32> to vector<8x32xf32>
    %31 = arith.mulf %26, %30 : vector<8x32xf32>
    %32 = vector.broadcast %8 : vector<1x32xf32> to vector<8x32xf32>
    %33 = arith.mulf %31, %32 : vector<8x32xf32>
    %34 = vector.broadcast %9 : vector<1x32xf32> to vector<8x32xf32>
    %35 = arith.addf %33, %34 : vector<8x32xf32>
    %36 = arith.truncf %35 : vector<8x32xf32> to vector<8x32xbf16>
    %37 = vector.shape_cast %36 : vector<8x32xbf16> to vector<1x8x32xbf16>
    %38 = vector.shape_cast %37 : vector<1x8x32xbf16> to vector<1x8x32xbf16>
    %39 = vector.broadcast %38 : vector<1x8x32xbf16> to vector<4x8x32xbf16>
    %c0_12 = arith.constant 0 : index
    %c0_13 = arith.constant 0 : index
    %c0_14 = arith.constant 0 : index
    %c0_15 = arith.constant 0 : index
    %40 = vector.load %arg4[%c0_12, %c0_13, %c0_14, %c0_15] : memref<1x4x32x24xbf16, #tpu.memory_space<vmem>>, vector<1x4x32x24xbf16>
    %41 = vector.shape_cast %40 : vector<1x4x32x24xbf16> to vector<4x32x24xbf16>
    %cst_16 = arith.constant dense<0.000000e+00> : vector<4x8x24xf32>
    %42 = tpu.matmul %39, %41, %cst_16 {dimension_numbers = #tpu.dot_dimension_numbers<[2], [1], [1], [2], [0, 0, 0, 1, 1, 2], [0], [0]>} : vector<4x8x32xbf16>, vector<4x32x24xbf16>, vector<4x8x24xf32> -> vector<4x8x24xf32>
    %c0_17 = arith.constant 0 : index
    %c0_18 = arith.constant 0 : index
    %c0_19 = arith.constant 0 : index
    %c0_20 = arith.constant 0 : index
    %43 = vector.load %arg5[%c0_17, %c0_18, %c0_19, %c0_20] : memref<1x4x1x24xf32, #tpu.memory_space<vmem>>, vector<1x4x1x24xf32>
    %44 = vector.shape_cast %43 : vector<1x4x1x24xf32> to vector<4x1x24xf32>
    %45 = vector.broadcast %44 : vector<4x1x24xf32> to vector<4x8x24xf32>
    %46 = arith.addf %42, %45 : vector<4x8x24xf32>
    %47 = vector.extract_strided_slice %46 {offsets = [0, 0, 0], sizes = [4, 8, 8], strides = [1, 1, 1]} : vector<4x8x24xf32> to vector<4x8x8xf32>
    %48 = arith.truncf %47 : vector<4x8x8xf32> to vector<4x8x8xbf16>
    %49 = vector.extract_strided_slice %46 {offsets = [0, 0, 8], sizes = [4, 8, 8], strides = [1, 1, 1]} : vector<4x8x24xf32> to vector<4x8x8xf32>
    %50 = arith.truncf %49 : vector<4x8x8xf32> to vector<4x8x8xbf16>
    %51 = vector.extract_strided_slice %46 {offsets = [0, 0, 16], sizes = [4, 8, 8], strides = [1, 1, 1]} : vector<4x8x24xf32> to vector<4x8x8xf32>
    %52 = arith.truncf %51 : vector<4x8x8xf32> to vector<4x8x8xbf16>
    %cst_21 = arith.constant dense<0.000000e+00> : vector<4x8x8xf32>
    %53 = tpu.matmul %48, %50, %cst_21 {dimension_numbers = #tpu.dot_dimension_numbers<[2], [2], [1], [1], [0, 0, 0, 1, 1, 1], [0], [0]>} : vector<4x8x8xbf16>, vector<4x8x8xbf16>, vector<4x8x8xf32> -> vector<4x8x8xf32>
    %54 = vector.shape_cast %5 : vector<1x8xf32> to vector<1x1x8xf32>
    %55 = vector.broadcast %54 : vector<1x1x8xf32> to vector<4x8x8xf32>
    %56 = arith.addf %53, %55 : vector<4x8x8xf32>
    %cst_22 = arith.constant dense<0xFF800000> : vector<4x8xf32>
    %57 = vector.multi_reduction <maximumf>, %56, %cst_22 [2] : vector<4x8x8xf32> to vector<4x8xf32>
    %58 = vector.shape_cast %57 : vector<4x8xf32> to vector<4x8x1xf32>
    %59 = vector.broadcast %58 : vector<4x8x1xf32> to vector<4x8x8xf32>
    %60 = arith.subf %56, %59 : vector<4x8x8xf32>
    %61 = math.exp %60 : vector<4x8x8xf32>
    %cst_23 = arith.constant dense<0.000000e+00> : vector<4x8xf32>
    %62 = vector.multi_reduction <add>, %61, %cst_23 [2] : vector<4x8x8xf32> to vector<4x8xf32>
    %63 = vector.shape_cast %62 : vector<4x8xf32> to vector<4x8x1xf32>
    %64 = tpu.reciprocal %63 {approx = true} : vector<4x8x1xf32> -> vector<4x8x1xf32>
    %65 = vector.broadcast %64 : vector<4x8x1xf32> to vector<4x8x8xf32>
    %66 = arith.mulf %61, %65 : vector<4x8x8xf32>
    %67 = arith.truncf %66 : vector<4x8x8xf32> to vector<4x8x8xbf16>
    %cst_24 = arith.constant dense<0.000000e+00> : vector<4x8x8xf32>
    %68 = tpu.matmul %67, %52, %cst_24 {dimension_numbers = #tpu.dot_dimension_numbers<[2], [1], [1], [2], [0, 0, 0, 1, 1, 2], [0], [0]>} : vector<4x8x8xbf16>, vector<4x8x8xbf16>, vector<4x8x8xf32> -> vector<4x8x8xf32>
    %69 = arith.truncf %68 : vector<4x8x8xf32> to vector<4x8x8xbf16>
    %c0_25 = arith.constant 0 : index
    %c0_26 = arith.constant 0 : index
    %c0_27 = arith.constant 0 : index
    %c0_28 = arith.constant 0 : index
    %70 = vector.load %arg6[%c0_25, %c0_26, %c0_27, %c0_28] : memref<1x4x8x32xbf16, #tpu.memory_space<vmem>>, vector<1x4x8x32xbf16>
    %71 = vector.shape_cast %70 : vector<1x4x8x32xbf16> to vector<4x8x32xbf16>
    %cst_29 = arith.constant dense<0.000000e+00> : vector<4x8x32xf32>
    %72 = tpu.matmul %69, %71, %cst_29 {dimension_numbers = #tpu.dot_dimension_numbers<[2], [1], [1], [2], [0, 0, 0, 1, 1, 2], [0], [0]>} : vector<4x8x8xbf16>, vector<4x8x32xbf16>, vector<4x8x32xf32> -> vector<4x8x32xf32>
    %cst_30 = arith.constant dense<0.000000e+00> : vector<8x32xf32>
    %73 = vector.multi_reduction <add>, %72, %cst_30 [0] : vector<4x8x32xf32> to vector<8x32xf32>
    %74 = vector.broadcast %10 : vector<1x32xf32> to vector<8x32xf32>
    %75 = arith.addf %73, %74 : vector<8x32xf32>
    %76 = arith.addf %3, %75 : vector<8x32xf32>
    %cst_31 = arith.constant dense<0.000000e+00> : vector<8xf32>
    %77 = vector.multi_reduction <add>, %76, %cst_31 [1] : vector<8x32xf32> to vector<8xf32>
    %78 = vector.shape_cast %77 : vector<8xf32> to vector<8x1xf32>
    %cst_32 = arith.constant 3.200000e+01 : f32
    %79 = vector.broadcast %cst_32 : f32 to vector<8x1xf32>
    %80 = arith.divf %78, %79 : vector<8x1xf32>
    %81 = vector.broadcast %80 : vector<8x1xf32> to vector<8x32xf32>
    %82 = arith.subf %76, %81 : vector<8x32xf32>
    %83 = arith.mulf %82, %82 : vector<8x32xf32>
    %cst_33 = arith.constant dense<0.000000e+00> : vector<8xf32>
    %84 = vector.multi_reduction <add>, %83, %cst_33 [1] : vector<8x32xf32> to vector<8xf32>
    %85 = vector.shape_cast %84 : vector<8xf32> to vector<8x1xf32>
    %cst_34 = arith.constant 3.200000e+01 : f32
    %86 = vector.broadcast %cst_34 : f32 to vector<8x1xf32>
    %87 = arith.divf %85, %86 : vector<8x1xf32>
    %88 = vector.broadcast %80 : vector<8x1xf32> to vector<8x32xf32>
    %89 = arith.subf %76, %88 : vector<8x32xf32>
    %cst_35 = arith.constant 9.99999974E-6 : f32
    %90 = vector.broadcast %cst_35 : f32 to vector<8x1xf32>
    %91 = arith.addf %87, %90 : vector<8x1xf32>
    %92 = math.rsqrt %91 : vector<8x1xf32>
    %93 = vector.broadcast %92 : vector<8x1xf32> to vector<8x32xf32>
    %94 = arith.mulf %89, %93 : vector<8x32xf32>
    %95 = vector.broadcast %11 : vector<1x32xf32> to vector<8x32xf32>
    %96 = arith.mulf %94, %95 : vector<8x32xf32>
    %97 = vector.broadcast %12 : vector<1x32xf32> to vector<8x32xf32>
    %98 = arith.addf %96, %97 : vector<8x32xf32>
    %99 = arith.truncf %98 : vector<8x32xf32> to vector<8x32xbf16>
    %c0_36 = arith.constant 0 : index
    %c0_37 = arith.constant 0 : index
    %c0_38 = arith.constant 0 : index
    %100 = vector.load %arg7[%c0_36, %c0_37, %c0_38] : memref<1x32x64xbf16, #tpu.memory_space<vmem>>, vector<1x32x64xbf16>
    %101 = vector.shape_cast %100 : vector<1x32x64xbf16> to vector<32x64xbf16>
    %cst_39 = arith.constant dense<0.000000e+00> : vector<8x64xf32>
    %102 = tpu.matmul %99, %101, %cst_39 {dimension_numbers = #tpu.dot_dimension_numbers<[1], [0], [0], [1], [0, 0, 1, 1], [], []>} : vector<8x32xbf16>, vector<32x64xbf16>, vector<8x64xf32> -> vector<8x64xf32>
    %c0_40 = arith.constant 0 : index
    %c0_41 = arith.constant 0 : index
    %c0_42 = arith.constant 0 : index
    %103 = vector.load %arg8[%c0_40, %c0_41, %c0_42] : memref<1x1x64xf32, #tpu.memory_space<vmem>>, vector<1x1x64xf32>
    %104 = vector.shape_cast %103 : vector<1x1x64xf32> to vector<1x64xf32>
    %105 = vector.broadcast %104 : vector<1x64xf32> to vector<8x64xf32>
    %106 = arith.addf %102, %105 : vector<8x64xf32>
    %cst_43 = arith.constant 0.000000e+00 : f32
    %107 = vector.broadcast %cst_43 : f32 to vector<8x64xf32>
    %108 = arith.maximumf %106, %107 : vector<8x64xf32>
    %109 = arith.truncf %108 : vector<8x64xf32> to vector<8x64xbf16>
    %c0_44 = arith.constant 0 : index
    %c0_45 = arith.constant 0 : index
    %c0_46 = arith.constant 0 : index
    %110 = vector.load %arg9[%c0_44, %c0_45, %c0_46] : memref<1x64x32xbf16, #tpu.memory_space<vmem>>, vector<1x64x32xbf16>
    %111 = vector.shape_cast %110 : vector<1x64x32xbf16> to vector<64x32xbf16>
    %cst_47 = arith.constant dense<0.000000e+00> : vector<8x32xf32>
    %112 = tpu.matmul %109, %111, %cst_47 {dimension_numbers = #tpu.dot_dimension_numbers<[1], [0], [0], [1], [0, 0, 1, 1], [], []>} : vector<8x64xbf16>, vector<64x32xbf16>, vector<8x32xf32> -> vector<8x32xf32>
    %113 = vector.broadcast %13 : vector<1x32xf32> to vector<8x32xf32>
    %114 = arith.addf %112, %113 : vector<8x32xf32>
    %115 = arith.addf %76, %114 : vector<8x32xf32>
    %c0_48 = arith.constant 0 : index
    %c0_49 = arith.constant 0 : index
    %116 = vector.load %arg14[%c0_48, %c0_49] : memref<8x32xf32, #tpu.memory_space<vmem>>, vector<8x32xf32>
    tpu.vector_store %arg14[%c0_48, %c0_49], %115 {strides = array<i32>} : memref<8x32xf32, #tpu.memory_space<vmem>>, vector<8x32xf32>,
    %c1_i32 = arith.constant 1 : i32
    %117 = arith.cmpi eq, %arg1, %c1_i32 : i32
    %118 = arith.extui %117 : i1 to i32
    %c0_i32_50 = arith.constant 0 : i32
    %119 = arith.cmpi ne, %118, %c0_i32_50 : i32
    scf.if %119 {
      %c0_51 = arith.constant 0 : index
      %c0_52 = arith.constant 0 : index
      %120 = vector.load %arg11[%c0_51, %c0_52] : memref<1x32xf32, #tpu.memory_space<vmem>>, vector<1x32xf32>
      %c0_53 = arith.constant 0 : index
      %c0_54 = arith.constant 0 : index
      %121 = vector.load %arg12[%c0_53, %c0_54] : memref<1x32xf32, #tpu.memory_space<vmem>>, vector<1x32xf32>
      %cst_55 = arith.constant dense<0.000000e+00> : vector<8xf32>
      %122 = vector.multi_reduction <add>, %115, %cst_55 [1] : vector<8x32xf32> to vector<8xf32>
      %123 = vector.shape_cast %122 : vector<8xf32> to vector<8x1xf32>
      %cst_56 = arith.constant 3.200000e+01 : f32
      %124 = vector.broadcast %cst_56 : f32 to vector<8x1xf32>
      %125 = arith.divf %123, %124 : vector<8x1xf32>
      %126 = vector.broadcast %125 : vector<8x1xf32> to vector<8x32xf32>
      %127 = arith.subf %115, %126 : vector<8x32xf32>
      %128 = arith.mulf %127, %127 : vector<8x32xf32>
      %cst_57 = arith.constant dense<0.000000e+00> : vector<8xf32>
      %129 = vector.multi_reduction <add>, %128, %cst_57 [1] : vector<8x32xf32> to vector<8xf32>
      %130 = vector.shape_cast %129 : vector<8xf32> to vector<8x1xf32>
      %cst_58 = arith.constant 3.200000e+01 : f32
      %131 = vector.broadcast %cst_58 : f32 to vector<8x1xf32>
      %132 = arith.divf %130, %131 : vector<8x1xf32>
      %133 = vector.broadcast %125 : vector<8x1xf32> to vector<8x32xf32>
      %134 = arith.subf %115, %133 : vector<8x32xf32>
      %cst_59 = arith.constant 9.99999974E-6 : f32
      %135 = vector.broadcast %cst_59 : f32 to vector<8x1xf32>
      %136 = arith.addf %132, %135 : vector<8x1xf32>
      %137 = math.rsqrt %136 : vector<8x1xf32>
      %138 = vector.broadcast %137 : vector<8x1xf32> to vector<8x32xf32>
      %139 = arith.mulf %134, %138 : vector<8x32xf32>
      %140 = vector.broadcast %120 : vector<1x32xf32> to vector<8x32xf32>
      %141 = arith.mulf %139, %140 : vector<8x32xf32>
      %142 = vector.broadcast %121 : vector<1x32xf32> to vector<8x32xf32>
      %143 = arith.addf %141, %142 : vector<8x32xf32>
      %c0_60 = arith.constant 0 : index
      %c0_61 = arith.constant 0 : index
      %c0_62 = arith.constant 0 : index
      %144 = vector.load %arg13[%c0_60, %c0_61, %c0_62] : memref<1x8x32xf32, #tpu.memory_space<vmem>>, vector<1x8x32xf32>
      %145 = vector.shape_cast %144 : vector<1x8x32xf32> to vector<8x32xf32>
      %146 = vector.shape_cast %143 : vector<8x32xf32> to vector<1x8x32xf32>
      tpu.vector_store %arg13[%c0_60, %c0_61, %c0_62], %146 {strides = array<i32>} : memref<1x8x32xf32, #tpu.memory_space<vmem>>, vector<1x8x32xf32>,
    } else {
    }
    return
  }
  func.func @transform_0(%arg0: i32, %arg1: i32) -> (i32, i32, i32) {
    %c0_i32 = arith.constant 0 : i32
    %c0_i32_0 = arith.constant 0 : i32
    %c0_i32_1 = arith.constant 0 : i32
    return %arg0, %c0_i32, %c0_i32_0 : i32, i32, i32
  }
  func.func @transform_1(%arg0: i32, %arg1: i32) -> (i32, i32, i32) {
    %c0_i32 = arith.constant 0 : i32
    %c0_i32_0 = arith.constant 0 : i32
    %c0_i32_1 = arith.constant 0 : i32
    return %arg0, %c0_i32, %c0_i32_0 : i32, i32, i32
  }
  func.func @transform_2(%arg0: i32, %arg1: i32) -> (i32, i32, i32, i32) {
    %c0_i32 = arith.constant 0 : i32
    %c0_i32_0 = arith.constant 0 : i32
    %c0_i32_1 = arith.constant 0 : i32
    %c0_i32_2 = arith.constant 0 : i32
    return %arg1, %c0_i32, %c0_i32_0, %c0_i32_1 : i32, i32, i32, i32
  }
  func.func @transform_3(%arg0: i32, %arg1: i32) -> (i32, i32, i32, i32) {
    %c0_i32 = arith.constant 0 : i32
    %c0_i32_0 = arith.constant 0 : i32
    %c0_i32_1 = arith.constant 0 : i32
    %c0_i32_2 = arith.constant 0 : i32
    return %arg1, %c0_i32, %c0_i32_0, %c0_i32_1 : i32, i32, i32, i32
  }
  func.func @transform_4(%arg0: i32, %arg1: i32) -> (i32, i32, i32, i32) {
    %c0_i32 = arith.constant 0 : i32
    %c0_i32_0 = arith.constant 0 : i32
    %c0_i32_1 = arith.constant 0 : i32
    %c0_i32_2 = arith.constant 0 : i32
    return %arg1, %c0_i32, %c0_i32_0, %c0_i32_1 : i32, i32, i32, i32
  }
  func.func @transform_5(%arg0: i32, %arg1: i32) -> (i32, i32, i32) {
    %c0_i32 = arith.constant 0 : i32
    %c0_i32_0 = arith.constant 0 : i32
    %c0_i32_1 = arith.constant 0 : i32
    return %arg1, %c0_i32, %c0_i32_0 : i32, i32, i32
  }
  func.func @transform_6(%arg0: i32, %arg1: i32) -> (i32, i32, i32) {
    %c0_i32 = arith.constant 0 : i32
    %c0_i32_0 = arith.constant 0 : i32
    %c0_i32_1 = arith.constant 0 : i32
    return %arg1, %c0_i32, %c0_i32_0 : i32, i32, i32
  }
  func.func @transform_7(%arg0: i32, %arg1: i32) -> (i32, i32, i32) {
    %c0_i32 = arith.constant 0 : i32
    %c0_i32_0 = arith.constant 0 : i32
    %c0_i32_1 = arith.constant 0 : i32
    return %arg1, %c0_i32, %c0_i32_0 : i32, i32, i32
  }
  func.func @transform_8(%arg0: i32, %arg1: i32) -> (i32, i32, i32) {
    %c0_i32 = arith.constant 0 : i32
    %c0_i32_0 = arith.constant 0 : i32
    %c0_i32_1 = arith.constant 0 : i32
    return %arg1, %c0_i32, %c0_i32_0 : i32, i32, i32
  }
  func.func @transform_9(%arg0: i32, %arg1: i32) -> (i32, i32) {
    %c0_i32 = arith.constant 0 : i32
    %c0_i32_0 = arith.constant 0 : i32
    %c0_i32_1 = arith.constant 0 : i32
    return %c0_i32, %c0_i32_0 : i32, i32
  }
  func.func @transform_10(%arg0: i32, %arg1: i32) -> (i32, i32) {
    %c0_i32 = arith.constant 0 : i32
    %c0_i32_0 = arith.constant 0 : i32
    %c0_i32_1 = arith.constant 0 : i32
    return %c0_i32, %c0_i32_0 : i32, i32
  }
  func.func @transform_11(%arg0: i32, %arg1: i32) -> (i32, i32, i32) {
    %c0_i32 = arith.constant 0 : i32
    %c0_i32_0 = arith.constant 0 : i32
    %c0_i32_1 = arith.constant 0 : i32
    return %arg0, %c0_i32, %c0_i32_0 : i32, i32, i32
  }
}

</mosaic_0001>

<llo_original>
// kernel: tpu_custom_call.1
$region0: #{tpu_custom_call.1}
  #allocation0 [shape = 'u32[]', space=smem, size = 0x4, offset = 0x4, fixed_abs, tag = 'smem constant byte address 0x4 - core index']
  #allocation1 [shape = 'u32[144,128]{1,0:T(1,128)}', space=vmem, size = 0x12000, scoped, tag = 'internal scratch']
  #allocation2 [shape = 'f32[8,32]{1,0:T(8,128)}', space=vmem, size = 0x1000, scoped, tag = 'scratch operand']
  %s0 = inlined_call_operand.vmem [shape: f32[2,8,32], index: 0, kind: input, shape index: {}]
  %s1 = inlined_call_operand.vmem [shape: f32[2,1,8], index: 1, kind: input, shape index: {}]
  %s2 = inlined_call_operand.vmem [shape: bf16[2,4,32,24], index: 2, kind: input, shape index: {}]
  %s3 = inlined_call_operand.vmem [shape: f32[2,4,1,24], index: 3, kind: input, shape index: {}]
  %s4 = inlined_call_operand.vmem [shape: bf16[2,4,8,32], index: 4, kind: input, shape index: {}]
  %s5 = inlined_call_operand.vmem [shape: bf16[2,32,64], index: 5, kind: input, shape index: {}]
  %s6 = inlined_call_operand.vmem [shape: f32[2,1,64], index: 6, kind: input, shape index: {}]
  %s7 = inlined_call_operand.vmem [shape: bf16[2,64,32], index: 7, kind: input, shape index: {}]
  %s8 = inlined_call_operand.vmem [shape: f32[2,6,32], index: 8, kind: input, shape index: {}]
  %s9 = inlined_call_operand.vmem [shape: f32[1,32], index: 9, kind: input, shape index: {}]
  %s10 = inlined_call_operand.vmem [shape: f32[1,32], index: 10, kind: input, shape index: {}]
  %s11 = inlined_call_operand.hbm [shape: f32[2,8,32], index: 11, kind: output, shape index: {}]
  %s12 = sld [smem:[#allocation0]]
  $region85: #{tpu_custom_call.1} parent=0
    _
  %s14 = ssub.s32 1, %s12
  %s15 = scalar_select 0, %s14, %s12
  $region1: #{tpu_custom_call.1} parent=0
    #allocation3 [shape = 'u8[8192]{0}', space=vmem, size = 0x2000, scoped, tag = 'output window, operand 0']
    #allocation4 [shape = 's32[2]{0}', space=sflag, size = 0x8, scoped, tag = 'scoped memory for tpu_custom_call.1']
    %16 = vsyncpa [#allocation4], 0
    %s17 = scalar_lea.sflag [#allocation4], 1
    %18 = vsyncpa %s17, 0
    loop: start=0, step=1, limit=6
    $region2: #{tpu_custom_call.1} parent=1 // loop_pre_header
      _
    $region3: #{tpu_custom_call.1} parent=1 // loop_header
      %s20 = sphi 0, %s24
      %p21 = scmp.ge.s32.totalorder %s20, 6
      %s27 = sphi 0, %s39
      %s28 = sphi 0, %s35
      %s29 = sphi 0, %s27
      %s30 = sphi 0, %s28
      %s31 = sphi 0, %s29
      %s32 = sphi 0, %s30
      %s42 = sphi 0, %s44
      %s45 = sphi 0, %s42
      %s46 = sphi 0, %s45
      %s62 = sphi 0, %s46
      %s68 = sphi 0, %s70
      %s71 = sphi 0, %s68
      %s72 = sphi 0, %s71
      %s88 = sphi 0, %s72
      %s94 = sphi 0, %s96
      %s97 = sphi 0, %s94
      %s98 = sphi 0, %s97
      %s114 = sphi 0, %s98
      %s120 = sphi 0, %s122
      %s123 = sphi 0, %s120
      %s124 = sphi 0, %s123
      %s140 = sphi 0, %s124
      %s146 = sphi 0, %s148
      %s149 = sphi 0, %s146
      %s150 = sphi 0, %s149
      %s166 = sphi 0, %s150
      %s172 = sphi 0, %s174
      %s175 = sphi 0, %s172
      %s176 = sphi 0, %s175
      %s192 = sphi 0, %s176
      %s198 = sphi 0, %s200
      %s201 = sphi 0, %s198
      %s202 = sphi 0, %s201
      %s218 = sphi 0, %s202
      %s224 = sphi 0, %s226
      %s227 = sphi 0, %s224
      %s228 = sphi 0, %s227
      %s244 = sphi 0, %s228
      %s250 = sphi 0, %s252
      %s253 = sphi 0, %s250
      %s254 = sphi 0, %s253
      %s270 = sphi 0, %s254
      %s274 = sphi 0, %s274
      %s276 = sphi 0, %s274
      %s277 = sphi 0, %s276
      %s291 = sphi 0, %s277
      %s295 = sphi 0, %s295
      %s297 = sphi 0, %s295
      %s298 = sphi 0, %s297
      %s312 = sphi 0, %s298
      %s318 = sphi 0, %s320
      %s321 = sphi 0, %s318
      %s322 = sphi 0, %s321
      %s338 = sphi 0, %s322
    $region4: #{tpu_custom_call.1} parent=1 // loop_header_branch
      %23 = sbr.rel (%p21) target = $region8
    $region5: #{tpu_custom_call.1} parent=1 // loop_body
      %s25 = ssub.s32 %s20, 1
      %s26 = ssub.s32 %s20, 2
      %s33 = sadd.s32 1, %s28
      %p34 = scmp.ge.s32.totalorder %s33, 2
      %s35 = scalar_select %p34, 0, %s33
      %s36 = sadd.s32 1, %s27
      %s37 = scalar_select %p34, %s36, %s27
      %p38 = scmp.ge.s32.totalorder %s37, 2
      %s39 = scalar_select %p38, 0, %s37
      %s40 = ssub.s32 %s27, %s39
      %p41 = scmp.eq.s32.totalorder %s40, 0
      %s43 = sadd.s32 %s42, 1
      %s44 = scalar_select %p41, %s42, %s43
      %p47 = pneg %p41
      %p48 = scmp.eq.s32.totalorder %s20, 3
      %p49 = por %p47, %p48
      %p50 = scmp.ne.s32.totalorder %s42, %s45
      %p51 = scmp.eq.s32.totalorder %s20, 0
      %p52 = por %p50, %p51
      %p53 = scmp.ne.s32.totalorder %s42, %s45
      %p54 = scmp.eq.s32.totalorder %s25, 3
      %p55 = por %p53, %p54
      %p56 = scmp.ne.s32.totalorder %s45, %s46
      %p57 = scmp.eq.s32.totalorder %s25, 0
      %p58 = por %p56, %p57
      %p59 = scmp.ne.s32.totalorder %s45, %s46
      %p60 = scmp.eq.s32.totalorder %s26, 3
      %p61 = por %p59, %p60
      %p63 = scmp.ne.s32.totalorder %s46, %s62
      %p64 = scmp.eq.s32.totalorder %s26, 0
      %p65 = por %p63, %p64
      %s66 = ssub.s32 %s27, %s39
      %p67 = scmp.eq.s32.totalorder %s66, 0
      %s69 = sadd.s32 %s68, 1
      %s70 = scalar_select %p67, %s68, %s69
      %p73 = pneg %p67
      %p74 = scmp.eq.s32.totalorder %s20, 3
      %p75 = por %p73, %p74
      %p76 = scmp.ne.s32.totalorder %s68, %s71
      %p77 = scmp.eq.s32.totalorder %s20, 0
      %p78 = por %p76, %p77
      %p79 = scmp.ne.s32.totalorder %s68, %s71
      %p80 = scmp.eq.s32.totalorder %s25, 3
      %p81 = por %p79, %p80
      %p82 = scmp.ne.s32.totalorder %s71, %s72
      %p83 = scmp.eq.s32.totalorder %s25, 0
      %p84 = por %p82, %p83
      %p85 = scmp.ne.s32.totalorder %s71, %s72
      %p86 = scmp.eq.s32.totalorder %s26, 3
      %p87 = por %p85, %p86
      %p89 = scmp.ne.s32.totalorder %s72, %s88
      %p90 = scmp.eq.s32.totalorder %s26, 0
      %p91 = por %p89, %p90
      %s92 = ssub.s32 %s28, %s35
      %p93 = scmp.eq.s32.totalorder %s92, 0
      %s95 = sadd.s32 %s94, 1
      %s96 = scalar_select %p93, %s94, %s95
      %p99 = pneg %p93
      %p100 = scmp.eq.s32.totalorder %s20, 3
      %p101 = por %p99, %p100
      %p102 = scmp.ne.s32.totalorder %s94, %s97
      %p103 = scmp.eq.s32.totalorder %s20, 0
      %p104 = por %p102, %p103
      %p105 = scmp.ne.s32.totalorder %s94, %s97
      %p106 = scmp.eq.s32.totalorder %s25, 3
      %p107 = por %p105, %p106
      %p108 = scmp.ne.s32.totalorder %s97, %s98
      %p109 = scmp.eq.s32.totalorder %s25, 0
      %p110 = por %p108, %p109
      %p111 = scmp.ne.s32.totalorder %s97, %s98
      %p112 = scmp.eq.s32.totalorder %s26, 3
      %p113 = por %p111, %p112
      %p115 = scmp.ne.s32.totalorder %s98, %s114
      %p116 = scmp.eq.s32.totalorder %s26, 0
      %p117 = por %p115, %p116
      %s118 = ssub.s32 %s28, %s35
      %p119 = scmp.eq.s32.totalorder %s118, 0
      %s121 = sadd.s32 %s120, 1
      %s122 = scalar_select %p119, %s120, %s121
      %p125 = pneg %p119
      %p126 = scmp.eq.s32.totalorder %s20, 3
      %p127 = por %p125, %p126
      %p128 = scmp.ne.s32.totalorder %s120, %s123
      %p129 = scmp.eq.s32.totalorder %s20, 0
      %p130 = por %p128, %p129
      %p131 = scmp.ne.s32.totalorder %s120, %s123
      %p132 = scmp.eq.s32.totalorder %s25, 3
      %p133 = por %p131, %p132
      %p134 = scmp.ne.s32.totalorder %s123, %s124
      %p135 = scmp.eq.s32.totalorder %s25, 0
      %p136 = por %p134, %p135
      %p137 = scmp.ne.s32.totalorder %s123, %s124
      %p138 = scmp.eq.s32.totalorder %s26, 3
      %p139 = por %p137, %p138
      %p141 = scmp.ne.s32.totalorder %s124, %s140
      %p142 = scmp.eq.s32.totalorder %s26, 0
      %p143 = por %p141, %p142
      %s144 = ssub.s32 %s28, %s35
      %p145 = scmp.eq.s32.totalorder %s144, 0
      %s147 = sadd.s32 %s146, 1
      %s148 = scalar_select %p145, %s146, %s147
      %p151 = pneg %p145
      %p152 = scmp.eq.s32.totalorder %s20, 3
      %p153 = por %p151, %p152
      %p154 = scmp.ne.s32.totalorder %s146, %s149
      %p155 = scmp.eq.s32.totalorder %s20, 0
      %p156 = por %p154, %p155
      %p157 = scmp.ne.s32.totalorder %s146, %s149
      %p158 = scmp.eq.s32.totalorder %s25, 3
      %p159 = por %p157, %p158
      %p160 = scmp.ne.s32.totalorder %s149, %s150
      %p161 = scmp.eq.s32.totalorder %s25, 0
      %p162 = por %p160, %p161
      %p163 = scmp.ne.s32.totalorder %s149, %s150
      %p164 = scmp.eq.s32.totalorder %s26, 3
      %p165 = por %p163, %p164
      %p167 = scmp.ne.s32.totalorder %s150, %s166
      %p168 = scmp.eq.s32.totalorder %s26, 0
      %p169 = por %p167, %p168
      %s170 = ssub.s32 %s28, %s35
      %p171 = scmp.eq.s32.totalorder %s170, 0
      %s173 = sadd.s32 %s172, 1
      %s174 = scalar_select %p171, %s172, %s173
      %p177 = pneg %p171
      %p178 = scmp.eq.s32.totalorder %s20, 3
      %p179 = por %p177, %p178
      %p180 = scmp.ne.s32.totalorder %s172, %s175
      %p181 = scmp.eq.s32.totalorder %s20, 0
      %p182 = por %p180, %p181
      %p183 = scmp.ne.s32.totalorder %s172, %s175
      %p184 = scmp.eq.s32.totalorder %s25, 3
      %p185 = por %p183, %p184
      %p186 = scmp.ne.s32.totalorder %s175, %s176
      %p187 = scmp.eq.s32.totalorder %s25, 0
      %p188 = por %p186, %p187
      %p189 = scmp.ne.s32.totalorder %s175, %s176
      %p190 = scmp.eq.s32.totalorder %s26, 3
      %p191 = por %p189, %p190
      %p193 = scmp.ne.s32.totalorder %s176, %s192
      %p194 = scmp.eq.s32.totalorder %s26, 0
      %p195 = por %p193, %p194
      %s196 = ssub.s32 %s28, %s35
      %p197 = scmp.eq.s32.totalorder %s196, 0
      %s199 = sadd.s32 %s198, 1
      %s200 = scalar_select %p197, %s198, %s199
      %p203 = pneg %p197
      %p204 = scmp.eq.s32.totalorder %s20, 3
      %p205 = por %p203, %p204
      %p206 = scmp.ne.s32.totalorder %s198, %s201
      %p207 = scmp.eq.s32.totalorder %s20, 0
      %p208 = por %p206, %p207
      %p209 = scmp.ne.s32.totalorder %s198, %s201
      %p210 = scmp.eq.s32.totalorder %s25, 3
      %p211 = por %p209, %p210
      %p212 = scmp.ne.s32.totalorder %s201, %s202
      %p213 = scmp.eq.s32.totalorder %s25, 0
      %p214 = por %p212, %p213
      %p215 = scmp.ne.s32.totalorder %s201, %s202
      %p216 = scmp.eq.s32.totalorder %s26, 3
      %p217 = por %p215, %p216
      %p219 = scmp.ne.s32.totalorder %s202, %s218
      %p220 = scmp.eq.s32.totalorder %s26, 0
      %p221 = por %p219, %p220
      %s222 = ssub.s32 %s28, %s35
      %p223 = scmp.eq.s32.totalorder %s222, 0
      %s225 = sadd.s32 %s224, 1
      %s226 = scalar_select %p223, %s224, %s225
      %p229 = pneg %p223
      %p230 = scmp.eq.s32.totalorder %s20, 3
      %p231 = por %p229, %p230
      %p232 = scmp.ne.s32.totalorder %s224, %s227
      %p233 = scmp.eq.s32.totalorder %s20, 0
      %p234 = por %p232, %p233
      %p235 = scmp.ne.s32.totalorder %s224, %s227
      %p236 = scmp.eq.s32.totalorder %s25, 3
      %p237 = por %p235, %p236
      %p238 = scmp.ne.s32.totalorder %s227, %s228
      %p239 = scmp.eq.s32.totalorder %s25, 0
      %p240 = por %p238, %p239
      %p241 = scmp.ne.s32.totalorder %s227, %s228
      %p242 = scmp.eq.s32.totalorder %s26, 3
      %p243 = por %p241, %p242
      %p245 = scmp.ne.s32.totalorder %s228, %s244
      %p246 = scmp.eq.s32.totalorder %s26, 0
      %p247 = por %p245, %p246
      %s248 = ssub.s32 %s28, %s35
      %p249 = scmp.eq.s32.totalorder %s248, 0
      %s251 = sadd.s32 %s250, 1
      %s252 = scalar_select %p249, %s250, %s251
      %p255 = pneg %p249
      %p256 = scmp.eq.s32.totalorder %s20, 3
      %p257 = por %p255, %p256
      %p258 = scmp.ne.s32.totalorder %s250, %s253
      %p259 = scmp.eq.s32.totalorder %s20, 0
      %p260 = por %p258, %p259
      %p261 = scmp.ne.s32.totalorder %s250, %s253
      %p262 = scmp.eq.s32.totalorder %s25, 3
      %p263 = por %p261, %p262
      %p264 = scmp.ne.s32.totalorder %s253, %s254
      %p265 = scmp.eq.s32.totalorder %s25, 0
      %p266 = por %p264, %p265
      %p267 = scmp.ne.s32.totalorder %s253, %s254
      %p268 = scmp.eq.s32.totalorder %s26, 3
      %p269 = por %p267, %p268
      %p271 = scmp.ne.s32.totalorder %s254, %s270
      %p272 = scmp.eq.s32.totalorder %s26, 0
      %p273 = por %p271, %p272
      %s275 = sadd.s32 %s274, 1
      %p278 = scmp.eq.s32.totalorder %s20, 3
      %p279 = scmp.ne.s32.totalorder %s274, %s276
      %p280 = scmp.eq.s32.totalorder %s20, 0
      %p281 = por %p279, %p280
      %p282 = scmp.ne.s32.totalorder %s274, %s276
      %p283 = scmp.eq.s32.totalorder %s25, 3
      %p284 = por %p282, %p283
      %p285 = scmp.ne.s32.totalorder %s276, %s277
      %p286 = scmp.eq.s32.totalorder %s25, 0
      %p287 = por %p285, %p286
      %p288 = scmp.ne.s32.totalorder %s276, %s277
      %p289 = scmp.eq.s32.totalorder %s26, 3
      %p290 = por %p288, %p289
      %p292 = scmp.ne.s32.totalorder %s277, %s291
      %p293 = scmp.eq.s32.totalorder %s26, 0
      %p294 = por %p292, %p293
      %s296 = sadd.s32 %s295, 1
      %p299 = scmp.eq.s32.totalorder %s20, 3
      %p300 = scmp.ne.s32.totalorder %s295, %s297
      %p301 = scmp.eq.s32.totalorder %s20, 0
      %p302 = por %p300, %p301
      %p303 = scmp.ne.s32.totalorder %s295, %s297
      %p304 = scmp.eq.s32.totalorder %s25, 3
      %p305 = por %p303, %p304
      %p306 = scmp.ne.s32.totalorder %s297, %s298
      %p307 = scmp.eq.s32.totalorder %s25, 0
      %p308 = por %p306, %p307
      %p309 = scmp.ne.s32.totalorder %s297, %s298
      %p310 = scmp.eq.s32.totalorder %s26, 3
      %p311 = por %p309, %p310
      %p313 = scmp.ne.s32.totalorder %s298, %s312
      %p314 = scmp.eq.s32.totalorder %s26, 0
      %p315 = por %p313, %p314
      %s316 = ssub.s32 %s27, %s39
      %p317 = scmp.eq.s32.totalorder %s316, 0
      %s319 = sadd.s32 %s318, 1
      %s320 = scalar_select %p317, %s318, %s319
      %p323 = pneg %p317
      %p324 = scmp.eq.s32.totalorder %s20, 3
      %p325 = por %p323, %p324
      %p326 = scmp.ne.s32.totalorder %s318, %s321
      %p327 = scmp.eq.s32.totalorder %s20, 0
      %p328 = por %p326, %p327
      %p329 = scmp.ne.s32.totalorder %s318, %s321
      %p330 = scmp.eq.s32.totalorder %s25, 3
      %p331 = por %p329, %p330
      %p332 = scmp.ne.s32.totalorder %s321, %s322
      %p333 = scmp.eq.s32.totalorder %s25, 0
      %p334 = por %p332, %p333
      %p335 = scmp.ne.s32.totalorder %s321, %s322
      %p336 = scmp.eq.s32.totalorder %s26, 3
      %p337 = por %p335, %p336
      %p339 = scmp.ne.s32.totalorder %s322, %s338
      %p340 = scmp.eq.s32.totalorder %s26, 0
      %p341 = por %p339, %p340
      %p342 = scmp.le.s32.totalorder 1, %s20
      %p343 = scmp.lt.s32.totalorder %s20, 5
      %p344 = pnand %p342, %p343
      %p345 = pneg %p344
      // Predicated region
      $region9: #{tpu_custom_call.1} parent=5 // pred_check
        _
      $region10: #{tpu_custom_call.1} parent=5 // pred_check_branch
        %347 = sbr.rel (%p344) target = $region12
      $region11: #{tpu_custom_call.1} parent=5 // pred_region
        %s348 = ssub.s32 %s20, 1
        // Predicated region
        $region13: #{tpu_custom_call.1} parent=11 // pred_check
          %p349 = pneg %p287
        $region14: #{tpu_custom_call.1} parent=11 // pred_check_branch
          %351 = sbr.rel (%p349) target = $region16
        $region15: #{tpu_custom_call.1} parent=11 // pred_region
          _
        $region16: #{tpu_custom_call.1} parent=11 // pred_fallthru
          _
        // Predicated region
        $region17: #{tpu_custom_call.1} parent=11 // pred_check
          %p352 = pneg %p308
        $region18: #{tpu_custom_call.1} parent=11 // pred_check_branch
          %354 = sbr.rel (%p352) target = $region20
        $region19: #{tpu_custom_call.1} parent=11 // pred_region
          _
        $region20: #{tpu_custom_call.1} parent=11 // pred_fallthru
          _
      $region12: #{tpu_custom_call.1} parent=5 // pred_fallthru
        _
      %p355 = scmp.lt.s32.totalorder %s20, 4
      // Predicated region
      $region21: #{tpu_custom_call.1} parent=5 // pred_check
        %p356 = pneg %p355
      $region22: #{tpu_custom_call.1} parent=5 // pred_check_branch
        %358 = sbr.rel (%p356) target = $region24
      $region23: #{tpu_custom_call.1} parent=5 // pred_region
        // Predicated region
        $region25: #{tpu_custom_call.1} parent=23 // pred_check
          %p359 = pneg %p52
        $region26: #{tpu_custom_call.1} parent=23 // pred_check_branch
          %361 = sbr.rel (%p359) target = $region28
        $region27: #{tpu_custom_call.1} parent=23 // pred_region
          %p362 = scmp.lt.s32.totalorder %s27, 1
          %s363 = scalar_select %p362, %s27, 1
          %s364 = smul.addr %s363, 8
          %s365 = scalar_lea.vmem %s0, %s364
        $region28: #{tpu_custom_call.1} parent=23 // pred_fallthru
          _
        // Predicated region
        $region29: #{tpu_custom_call.1} parent=23 // pred_check
          %p366 = pneg %p78
        $region30: #{tpu_custom_call.1} parent=23 // pred_check_branch
          %368 = sbr.rel (%p366) target = $region32
        $region31: #{tpu_custom_call.1} parent=23 // pred_region
          %p369 = scmp.lt.s32.totalorder %s27, 1
          %s370 = scalar_select %p369, %s27, 1
          %s371 = scalar_lea.vmem %s1, %s370
        $region32: #{tpu_custom_call.1} parent=23 // pred_fallthru
          _
        // Predicated region
        $region33: #{tpu_custom_call.1} parent=23 // pred_check
          %p372 = pneg %p104
        $region34: #{tpu_custom_call.1} parent=23 // pred_check_branch
          %374 = sbr.rel (%p372) target = $region36
        $region35: #{tpu_custom_call.1} parent=23 // pred_region
          %p375 = scmp.lt.s32.totalorder %s28, 1
          %s376 = scalar_select %p375, %s28, 1
          %s377 = smul.addr %s376, 16
          %s378 = smul.addr %s377, 4
          %s379 = scalar_lea.vmem %s2, %s378
        $region36: #{tpu_custom_call.1} parent=23 // pred_fallthru
          _
        // Predicated region
        $region37: #{tpu_custom_call.1} parent=23 // pred_check
          %p380 = pneg %p130
        $region38: #{tpu_custom_call.1} parent=23 // pred_check_branch
          %382 = sbr.rel (%p380) target = $region40
        $region39: #{tpu_custom_call.1} parent=23 // pred_region
          %p383 = scmp.lt.s32.totalorder %s28, 1
          %s384 = scalar_select %p383, %s28, 1
          %s385 = smul.addr %s384, 4
          %s386 = scalar_lea.vmem %s3, %s385
        $region40: #{tpu_custom_call.1} parent=23 // pred_fallthru
          _
        // Predicated region
        $region41: #{tpu_custom_call.1} parent=23 // pred_check
          %p387 = pneg %p156
        $region42: #{tpu_custom_call.1} parent=23 // pred_check_branch
          %389 = sbr.rel (%p387) target = $region44
        $region43: #{tpu_custom_call.1} parent=23 // pred_region
          %p390 = scmp.lt.s32.totalorder %s28, 1
          %s391 = scalar_select %p390, %s28, 1
          %s392 = smul.addr %s391, 4
          %s393 = smul.addr %s392, 4
          %s394 = scalar_lea.vmem %s4, %s393
        $region44: #{tpu_custom_call.1} parent=23 // pred_fallthru
          _
        // Predicated region
        $region45: #{tpu_custom_call.1} parent=23 // pred_check
          %p395 = pneg %p182
        $region46: #{tpu_custom_call.1} parent=23 // pred_check_branch
          %397 = sbr.rel (%p395) target = $region48
        $region47: #{tpu_custom_call.1} parent=23 // pred_region
          %p398 = scmp.lt.s32.totalorder %s28, 1
          %s399 = scalar_select %p398, %s28, 1
          %s400 = smul.addr %s399, 4
          %s401 = smul.addr %s400, 4
          %s402 = scalar_lea.vmem %s5, %s401
        $region48: #{tpu_custom_call.1} parent=23 // pred_fallthru
          _
        // Predicated region
        $region49: #{tpu_custom_call.1} parent=23 // pred_check
          %p403 = pneg %p208
        $region50: #{tpu_custom_call.1} parent=23 // pred_check_branch
          %405 = sbr.rel (%p403) target = $region52
        $region51: #{tpu_custom_call.1} parent=23 // pred_region
          %p406 = scmp.lt.s32.totalorder %s28, 1
          %s407 = scalar_select %p406, %s28, 1
          %s408 = scalar_lea.vmem %s6, %s407
        $region52: #{tpu_custom_call.1} parent=23 // pred_fallthru
          _
        // Predicated region
        $region53: #{tpu_custom_call.1} parent=23 // pred_check
          %p409 = pneg %p234
        $region54: #{tpu_custom_call.1} parent=23 // pred_check_branch
          %411 = sbr.rel (%p409) target = $region56
        $region55: #{tpu_custom_call.1} parent=23 // pred_region
          %p412 = scmp.lt.s32.totalorder %s28, 1
          %s413 = scalar_select %p412, %s28, 1
          %s414 = smul.addr %s413, 8
          %s415 = smul.addr %s414, 4
          %s416 = scalar_lea.vmem %s7, %s415
        $region56: #{tpu_custom_call.1} parent=23 // pred_fallthru
          _
        // Predicated region
        $region57: #{tpu_custom_call.1} parent=23 // pred_check
          %p417 = pneg %p260
        $region58: #{tpu_custom_call.1} parent=23 // pred_check_branch
          %419 = sbr.rel (%p417) target = $region60
        $region59: #{tpu_custom_call.1} parent=23 // pred_region
          %p420 = scmp.lt.s32.totalorder %s28, 1
          %s421 = scalar_select %p420, %s28, 1
          %s422 = smul.addr %s421, 8
          %s423 = scalar_lea.vmem %s8, %s422
        $region60: #{tpu_custom_call.1} parent=23 // pred_fallthru
          _
      $region24: #{tpu_custom_call.1} parent=5 // pred_fallthru
        _
      %p424 = scmp.le.s32.totalorder 1, %s20
      %p425 = scmp.lt.s32.totalorder %s20, 5
      %p426 = pnand %p424, %p425
      %p427 = pneg %p426
      // Predicated region
      $region61: #{tpu_custom_call.1} parent=5 // pred_check
        _
      $region62: #{tpu_custom_call.1} parent=5 // pred_check_branch
        %429 = sbr.rel (%p426) target = $region64
      $region63: #{tpu_custom_call.1} parent=5 // pred_region
        %s430 = ssub.s32 %s20, 1
        %p431 = scmp.lt.s32.totalorder %s29, 1
        %s432 = scalar_select %p431, %s29, 1
        %s433 = smul.addr %s432, 8
        %s434 = scalar_lea.vmem %s0, %s433
        %p435 = pneg %p58
        %p436 = pneg %p55
        %p437 = scmp.lt.s32.totalorder %s29, 1
        %s438 = scalar_select %p437, %s29, 1
        %s439 = scalar_lea.vmem %s1, %s438
        %p440 = pneg %p84
        %p441 = pneg %p81
        %p442 = scmp.lt.s32.totalorder %s30, 1
        %s443 = scalar_select %p442, %s30, 1
        %s444 = smul.addr %s443, 16
        %s445 = smul.addr %s444, 4
        %s446 = scalar_lea.vmem %s2, %s445
        %p447 = pneg %p110
        %p448 = pneg %p107
        %p449 = scmp.lt.s32.totalorder %s30, 1
        %s450 = scalar_select %p449, %s30, 1
        %s451 = smul.addr %s450, 4
        %s452 = scalar_lea.vmem %s3, %s451
        %p453 = pneg %p136
        %p454 = pneg %p133
        %p455 = scmp.lt.s32.totalorder %s30, 1
        %s456 = scalar_select %p455, %s30, 1
        %s457 = smul.addr %s456, 4
        %s458 = smul.addr %s457, 4
        %s459 = scalar_lea.vmem %s4, %s458
        %p460 = pneg %p162
        %p461 = pneg %p159
        %p462 = scmp.lt.s32.totalorder %s30, 1
        %s463 = scalar_select %p462, %s30, 1
        %s464 = smul.addr %s463, 4
        %s465 = smul.addr %s464, 4
        %s466 = scalar_lea.vmem %s5, %s465
        %p467 = pneg %p188
        %p468 = pneg %p185
        %p469 = scmp.lt.s32.totalorder %s30, 1
        %s470 = scalar_select %p469, %s30, 1
        %s471 = scalar_lea.vmem %s6, %s470
        %p472 = pneg %p214
        %p473 = pneg %p211
        %p474 = scmp.lt.s32.totalorder %s30, 1
        %s475 = scalar_select %p474, %s30, 1
        %s476 = smul.addr %s475, 8
        %s477 = smul.addr %s476, 4
        %s478 = scalar_lea.vmem %s7, %s477
        %p479 = pneg %p240
        %p480 = pneg %p237
        %p481 = scmp.lt.s32.totalorder %s30, 1
        %s482 = scalar_select %p481, %s30, 1
        %s483 = smul.addr %s482, 8
        %s484 = scalar_lea.vmem %s8, %s483
        %p485 = pneg %p266
        %p486 = pneg %p263
        %p487 = pneg %p287
        %p488 = pneg %p284
        %p489 = pneg %p308
        %p490 = pneg %p305
        %p491 = pneg %p334
        %p492 = pneg %p331
        %s493 = sand.u32 %s321, 1
        %s494 = scalar_lea.sflag [#allocation4], %s493
        %s495 = sand.u32 %s321, 1
        %s496 = smul.addr %s495, 8
        %s497 = scalar_lea.vmem [#allocation3], %s496
        %p498 = scmp.lt.s32.totalorder %s29, 1
        %s499 = scalar_select %p498, %s29, 1
        %s500 = smul.addr %s499, 8
        %s501 = scalar_lea.vmem %s0, %s500
        %p502 = scmp.lt.s32.totalorder %s29, 1
        %s503 = scalar_select %p502, %s29, 1
        %s504 = scalar_lea.vmem %s1, %s503
        %p505 = scmp.lt.s32.totalorder %s30, 1
        %s506 = scalar_select %p505, %s30, 1
        %s507 = smul.addr %s506, 16
        %s508 = smul.addr %s507, 4
        %s509 = scalar_lea.vmem %s2, %s508
        %p510 = scmp.lt.s32.totalorder %s30, 1
        %s511 = scalar_select %p510, %s30, 1
        %s512 = smul.addr %s511, 4
        %s513 = scalar_lea.vmem %s3, %s512
        %p514 = scmp.lt.s32.totalorder %s30, 1
        %s515 = scalar_select %p514, %s30, 1
        %s516 = smul.addr %s515, 4
        %s517 = smul.addr %s516, 4
        %s518 = scalar_lea.vmem %s4, %s517
        %p519 = scmp.lt.s32.totalorder %s30, 1
        %s520 = scalar_select %p519, %s30, 1
        %s521 = smul.addr %s520, 4
        %s522 = smul.addr %s521, 4
        %s523 = scalar_lea.vmem %s5, %s522
        %p524 = scmp.lt.s32.totalorder %s30, 1
        %s525 = scalar_select %p524, %s30, 1
        %s526 = scalar_lea.vmem %s6, %s525
        %p527 = scmp.lt.s32.totalorder %s30, 1
        %s528 = scalar_select %p527, %s30, 1
        %s529 = smul.addr %s528, 8
        %s530 = smul.addr %s529, 4
        %s531 = scalar_lea.vmem %s7, %s530
        %p532 = scmp.lt.s32.totalorder %s30, 1
        %s533 = scalar_select %p532, %s30, 1
        %s534 = smul.addr %s533, 8
        %s535 = scalar_lea.vmem %s8, %s534
        %p537 = scmp.eq.s32.totalorder %s30, 0
        // Predicated region
        $region65: #{tpu_custom_call.1} parent=63 // pred_check
          %p538 = pneg %p537
        $region66: #{tpu_custom_call.1} parent=63 // pred_check_branch
          %540 = sbr.rel (%p538) target = $region68
        $region67: #{tpu_custom_call.1} parent=63 // pred_region
          %v541 = vld [vmem:[%s501] sm:$0xff]
          %vm542 = vcmask 261120
          %543 = vst.msk [vmem:[#allocation2] sm:$0xff] %vm542, %v541
        $region68: #{tpu_custom_call.1} parent=63 // pred_fallthru
          _
        %v544 = vld [vmem:[#allocation2] sm:$0xff]
        %v545 = vld [vmem:[%s504] sm:$0x1]
        %v546 = vld [vmem:[%s535] sm:$0x3f]
        %vm547 = vcmask 261120
        %v548 = vsel %vm547, %v544, 0.0
        %549 = vadd.xlane.f32.xlu0 %v548
        %v550 = vpop.xlane.xlu0 %549
        %v551 = vrcp.pop 32.0
        %v552 = vmul.f32 %v550, %v551
        %v553 = vsub.f32 %v544, %v552
        %v554 = vmul.f32 %v553, %v553
        %v555 = vsel %vm547, %v554, 0.0
        %556 = vadd.xlane.f32.xlu0 %v555
        %v557 = vpop.xlane.xlu0 %556
        %v558 = vmul.f32 %v557, %v551
        %v559 = vadd.f32 %v558, 1e-05
        %v560 = vrsqrt.pop %v559
        %v561 = vmul.f32 %v553, %v560
        %v562 = vlaneseq
        %v563 = vshrl.u32 %v562, 7
        %v564 = vsub.s32 0, %v563
        %v565 = vrot.slane %v546, %v564
        %v566 = vmul.f32 %v561, %v565
        %v567 = vlaneseq
        %v568 = vshrl.u32 %v567, 7
        %v569 = vsub.s32 1, %v568
        %v570 = vrot.slane %v546, %v569
        %v571 = vadd.f32 %v566, %v570
        %v572 = vpack.c.bf16 %v571, %v571
        %v573 = vld [vmem:[%s509] sm:$0xf]
        %v574 = vld [vmem:[%s509 + $0x4] sm:$0xf]
        %v575 = vld [vmem:[%s509 + $0x8] sm:$0xf]
        %v576 = vld [vmem:[%s509 + $0xc] sm:$0xf]
        %v577 = vld [vmem:[%s509 + $0x10] sm:$0xf]
        %v578 = vld [vmem:[%s509 + $0x14] sm:$0xf]
        %v579 = vld [vmem:[%s509 + $0x18] sm:$0xf]
        %v580 = vld [vmem:[%s509 + $0x1c] sm:$0xf]
        %v581 = vld [vmem:[%s509 + $0x20] sm:$0xf]
        %v582 = vld [vmem:[%s509 + $0x24] sm:$0xf]
        %v583 = vld [vmem:[%s509 + $0x28] sm:$0xf]
        %v584 = vld [vmem:[%s509 + $0x2c] sm:$0xf]
        %v585 = vld [vmem:[%s509 + $0x30] sm:$0xf]
        %v586 = vld [vmem:[%s509 + $0x34] sm:$0xf]
        %v587 = vld [vmem:[%s509 + $0x38] sm:$0xf]
        %v588 = vld [vmem:[%s509 + $0x3c] sm:$0xf]
        %v589 = vld [vmem:[%s513] sm:$0x1]
        %v590 = vld [vmem:[%s513 + $0x1] sm:$0x1]
        %v591 = vld [vmem:[%s513 + $0x2] sm:$0x1]
        %v592 = vld [vmem:[%s513 + $0x3] sm:$0x1]
        %v597 = vlaneseq
        %v598 = vshrl.u32 %v597, 7
        %v599 = vsub.s32 0, %v598
        %v600 = vrot.slane %v589, %v599
        %v601 = vlaneseq
        %v602 = vshrl.u32 %v601, 7
        %v603 = vsub.s32 0, %v602
        %v604 = vrot.slane %v590, %v603
        %v605 = vlaneseq
        %v606 = vshrl.u32 %v605, 7
        %v607 = vsub.s32 0, %v606
        %v608 = vrot.slane %v591, %v607
        %v609 = vlaneseq
        %v610 = vshrl.u32 %v609, 7
        %v611 = vsub.s32 0, %v610
        %v612 = vrot.slane %v592, %v611
        %v621 = vunpack.c.l.b16 %v573
        %v622 = vunpack.c.l.b16 %v574
        %v623 = vunpack.c.l.b16 %v575
        %v624 = vunpack.c.l.b16 %v576
        %v625 = vpack.c.b16 %v622, %v621
        %v626 = vpack.c.b16 %v624, %v623
        %v630 = vsel %vm547, %v572, 0
        %632 = vmatprep.subr.bf16.mxu0 0
        %633 = vmatpush1.bf16.msra.mxu0 %v625
        %634 = vmatprep.subr.bf16.mxu0 0
        %635 = vmatpush1.bf16.msra.mxu0 %v626
        %636 = vmatprep.subr.bf16.mxu0 0
        %637 = vmatpush1.bf16.msra.mxu0 0
        %638 = vmatprep.subr.bf16.mxu0 0
        %639 = vmatpush1.bf16.msra.mxu0 0
        %640 = vmatprep.subr.bf16.mxu0 0
        %641 = vmatpush1.bf16.msra.mxu0 0
        %642 = vmatprep.subr.bf16.mxu0 0
        %643 = vmatpush1.bf16.msra.mxu0 0
        %644 = vmatprep.subr.bf16.mxu0 0
        %645 = vmatpush1.bf16.msra.mxu0 0
        %646 = vmatprep.subr.bf16.mxu0 0
        %647 = vmatpush1.bf16.msra.mxu0 0
        %648 = vmatprep.subr.bf16.mxu0 0
        %649 = vmatpush1.bf16.msra.mxu0 0
        %650 = vmatprep.subr.bf16.mxu0 0
        %651 = vmatpush1.bf16.msra.mxu0 0
        %652 = vmatprep.subr.bf16.mxu0 0
        %653 = vmatpush1.bf16.msra.mxu0 0
        %654 = vmatprep.subr.bf16.mxu0 0
        %655 = vmatpush1.bf16.msra.mxu0 0
        %656 = vmatprep.subr.bf16.mxu0 0
        %657 = vmatpush1.bf16.msra.mxu0 0
        %658 = vmatprep.subr.bf16.mxu0 0
        %659 = vmatpush1.bf16.msra.mxu0 0
        %660 = vmatprep.subr.bf16.mxu0 0
        %661 = vmatpush1.bf16.msra.mxu0 0
        %662 = vmatprep.subr.bf16.mxu0 0
        %663 = vmatpush1.bf16.msra.mxu0 0
        %664 = vmatprep.mubr.bf16.mxu0 0
        %665 = vmatmul.mubr.bf16.gmra.mrb[0].mxu0 %v630
        %v666 = vpop.f32.mrb[0].mxu0
        %v667 = vadd.f32 %v600, %v666
        %v668 = vpop.f32.mrb[0].mxu0
        %v669 = vpop.f32.mrb[0].mxu0
        %v670 = vpop.f32.mrb[0].mxu0
        %671 = vdwg.mxu0
        %v676 = vunpack.c.l.b16 %v577
        %v677 = vunpack.c.l.b16 %v578
        %v678 = vunpack.c.l.b16 %v579
        %v679 = vunpack.c.l.b16 %v580
        %v680 = vpack.c.b16 %v677, %v676
        %v681 = vpack.c.b16 %v679, %v678
        %684 = vmatprep.subr.bf16.mxu0 0
        %685 = vmatpush1.bf16.msra.mxu0 %v680
        %686 = vmatprep.subr.bf16.mxu0 0
        %687 = vmatpush1.bf16.msra.mxu0 %v681
        %688 = vmatprep.subr.bf16.mxu0 0
        %689 = vmatpush1.bf16.msra.mxu0 0
        %690 = vmatprep.subr.bf16.mxu0 0
        %691 = vmatpush1.bf16.msra.mxu0 0
        %692 = vmatprep.subr.bf16.mxu0 0
        %693 = vmatpush1.bf16.msra.mxu0 0
        %694 = vmatprep.subr.bf16.mxu0 0
        %695 = vmatpush1.bf16.msra.mxu0 0
        %696 = vmatprep.subr.bf16.mxu0 0
        %697 = vmatpush1.bf16.msra.mxu0 0
        %698 = vmatprep.subr.bf16.mxu0 0
        %699 = vmatpush1.bf16.msra.mxu0 0
        %700 = vmatprep.subr.bf16.mxu0 0
        %701 = vmatpush1.bf16.msra.mxu0 0
        %702 = vmatprep.subr.bf16.mxu0 0
        %703 = vmatpush1.bf16.msra.mxu0 0
        %704 = vmatprep.subr.bf16.mxu0 0
        %705 = vmatpush1.bf16.msra.mxu0 0
        %706 = vmatprep.subr.bf16.mxu0 0
        %707 = vmatpush1.bf16.msra.mxu0 0
        %708 = vmatprep.subr.bf16.mxu0 0
        %709 = vmatpush1.bf16.msra.mxu0 0
        %710 = vmatprep.subr.bf16.mxu0 0
        %711 = vmatpush1.bf16.msra.mxu0 0
        %712 = vmatprep.subr.bf16.mxu0 0
        %713 = vmatpush1.bf16.msra.mxu0 0
        %714 = vmatprep.subr.bf16.mxu0 0
        %715 = vmatpush1.bf16.msra.mxu0 0
        %716 = vmatprep.mubr.bf16.mxu0 0
        %717 = vmatmul.mubr.bf16.gmra.mrb[0].mxu0 %v630
        %v718 = vpop.f32.mrb[0].mxu0
        %v719 = vadd.f32 %v604, %v718
        %v720 = vpop.f32.mrb[0].mxu0
        %v721 = vpop.f32.mrb[0].mxu0
        %v722 = vpop.f32.mrb[0].mxu0
        %723 = vdwg.mxu0
        %v728 = vunpack.c.l.b16 %v581
        %v729 = vunpack.c.l.b16 %v582
        %v730 = vunpack.c.l.b16 %v583
        %v731 = vunpack.c.l.b16 %v584
        %v732 = vpack.c.b16 %v729, %v728
        %v733 = vpack.c.b16 %v731, %v730
        %736 = vmatprep.subr.bf16.mxu0 0
        %737 = vmatpush1.bf16.msra.mxu0 %v732
        %738 = vmatprep.subr.bf16.mxu0 0
        %739 = vmatpush1.bf16.msra.mxu0 %v733
        %740 = vmatprep.subr.bf16.mxu0 0
        %741 = vmatpush1.bf16.msra.mxu0 0
        %742 = vmatprep.subr.bf16.mxu0 0
        %743 = vmatpush1.bf16.msra.mxu0 0
        %744 = vmatprep.subr.bf16.mxu0 0
        %745 = vmatpush1.bf16.msra.mxu0 0
        %746 = vmatprep.subr.bf16.mxu0 0
        %747 = vmatpush1.bf16.msra.mxu0 0
        %748 = vmatprep.subr.bf16.mxu0 0
        %749 = vmatpush1.bf16.msra.mxu0 0
        %750 = vmatprep.subr.bf16.mxu0 0
        %751 = vmatpush1.bf16.msra.mxu0 0
        %752 = vmatprep.subr.bf16.mxu0 0
        %753 = vmatpush1.bf16.msra.mxu0 0
        %754 = vmatprep.subr.bf16.mxu0 0
        %755 = vmatpush1.bf16.msra.mxu0 0
        %756 = vmatprep.subr.bf16.mxu0 0
        %757 = vmatpush1.bf16.msra.mxu0 0
        %758 = vmatprep.subr.bf16.mxu0 0
        %759 = vmatpush1.bf16.msra.mxu0 0
        %760 = vmatprep.subr.bf16.mxu0 0
        %761 = vmatpush1.bf16.msra.mxu0 0
        %762 = vmatprep.subr.bf16.mxu0 0
        %763 = vmatpush1.bf16.msra.mxu0 0
        %764 = vmatprep.subr.bf16.mxu0 0
        %765 = vmatpush1.bf16.msra.mxu0 0
        %766 = vmatprep.subr.bf16.mxu0 0
        %767 = vmatpush1.bf16.msra.mxu0 0
        %768 = vmatprep.mubr.bf16.mxu0 0
        %769 = vmatmul.mubr.bf16.gmra.mrb[0].mxu0 %v630
        %v770 = vpop.f32.mrb[0].mxu0
        %v771 = vadd.f32 %v608, %v770
        %v772 = vpop.f32.mrb[0].mxu0
        %v773 = vpop.f32.mrb[0].mxu0
        %v774 = vpop.f32.mrb[0].mxu0
        %775 = vdwg.mxu0
        %v780 = vunpack.c.l.b16 %v585
        %v781 = vunpack.c.l.b16 %v586
        %v782 = vunpack.c.l.b16 %v587
        %v783 = vunpack.c.l.b16 %v588
        %v784 = vpack.c.b16 %v781, %v780
        %v785 = vpack.c.b16 %v783, %v782
        %788 = vmatprep.subr.bf16.mxu0 0
        %789 = vmatpush1.bf16.msra.mxu0 %v784
        %790 = vmatprep.subr.bf16.mxu0 0
        %791 = vmatpush1.bf16.msra.mxu0 %v785
        %792 = vmatprep.subr.bf16.mxu0 0
        %793 = vmatpush1.bf16.msra.mxu0 0
        %794 = vmatprep.subr.bf16.mxu0 0
        %795 = vmatpush1.bf16.msra.mxu0 0
        %796 = vmatprep.subr.bf16.mxu0 0
        %797 = vmatpush1.bf16.msra.mxu0 0
        %798 = vmatprep.subr.bf16.mxu0 0
        %799 = vmatpush1.bf16.msra.mxu0 0
        %800 = vmatprep.subr.bf16.mxu0 0
        %801 = vmatpush1.bf16.msra.mxu0 0
        %802 = vmatprep.subr.bf16.mxu0 0
        %803 = vmatpush1.bf16.msra.mxu0 0
        %804 = vmatprep.subr.bf16.mxu0 0
        %805 = vmatpush1.bf16.msra.mxu0 0
        %806 = vmatprep.subr.bf16.mxu0 0
        %807 = vmatpush1.bf16.msra.mxu0 0
        %808 = vmatprep.subr.bf16.mxu0 0
        %809 = vmatpush1.bf16.msra.mxu0 0
        %810 = vmatprep.subr.bf16.mxu0 0
        %811 = vmatpush1.bf16.msra.mxu0 0
        %812 = vmatprep.subr.bf16.mxu0 0
        %813 = vmatpush1.bf16.msra.mxu0 0
        %814 = vmatprep.subr.bf16.mxu0 0
        %815 = vmatpush1.bf16.msra.mxu0 0
        %816 = vmatprep.subr.bf16.mxu0 0
        %817 = vmatpush1.bf16.msra.mxu0 0
        %818 = vmatprep.subr.bf16.mxu0 0
        %819 = vmatpush1.bf16.msra.mxu0 0
        %820 = vmatprep.mubr.bf16.mxu0 0
        %821 = vmatmul.mubr.bf16.gmra.mrb[0].mxu0 %v630
        %v822 = vpop.f32.mrb[0].mxu0
        %v823 = vadd.f32 %v612, %v822
        %v824 = vpop.f32.mrb[0].mxu0
        %v825 = vpop.f32.mrb[0].mxu0
        %v826 = vpop.f32.mrb[0].mxu0
        %827 = vdwg.mxu0
        %v828 = vpack.c.bf16 %v667, %v667
        %v829 = vpack.c.bf16 %v719, %v719
        %v830 = vpack.c.bf16 %v771, %v771
        %v831 = vpack.c.bf16 %v823, %v823
        %v833 = vlaneseq
        %v834 = vshrl.u32 %v833, 7
        %v835 = vsub.s32 0, %v834
        %v836 = vrot.slane %v545, %v835
        %839 = vrot.lane.b32.xlu0 %v828, 120
        %v840 = vpop.permute.xlu0 %839
        %vm841 = vcmask 64512
        %v843 = vsel %vm841, %v828, 0
        %v846 = vsel %vm841, %v840, 0
        %848 = vmatprep.subr.bf16.mxu0 0
        %849 = vmatpush1.bf16.xpose.msra.mxu0 %v846
        %850 = vmatprep.subr.bf16.mxu0 0
        %851 = vmatpush1.bf16.xpose.msra.mxu0 0
        %852 = vmatprep.subr.bf16.mxu0 0
        %853 = vmatpush1.bf16.xpose.msra.mxu0 0
        %854 = vmatprep.subr.bf16.mxu0 0
        %855 = vmatpush1.bf16.xpose.msra.mxu0 0
        %856 = vmatprep.subr.bf16.mxu0 0
        %857 = vmatpush1.bf16.xpose.msra.mxu0 0
        %858 = vmatprep.subr.bf16.mxu0 0
        %859 = vmatpush1.bf16.xpose.msra.mxu0 0
        %860 = vmatprep.subr.bf16.mxu0 0
        %861 = vmatpush1.bf16.xpose.msra.mxu0 0
        %862 = vmatprep.subr.bf16.mxu0 0
        %863 = vmatpush1.bf16.xpose.msra.mxu0 0
        %864 = vmatprep.subr.bf16.mxu0 0
        %865 = vmatpush1.bf16.xpose.msra.mxu0 0
        %866 = vmatprep.subr.bf16.mxu0 0
        %867 = vmatpush1.bf16.xpose.msra.mxu0 0
        %868 = vmatprep.subr.bf16.mxu0 0
        %869 = vmatpush1.bf16.xpose.msra.mxu0 0
        %870 = vmatprep.subr.bf16.mxu0 0
        %871 = vmatpush1.bf16.xpose.msra.mxu0 0
        %872 = vmatprep.subr.bf16.mxu0 0
        %873 = vmatpush1.bf16.xpose.msra.mxu0 0
        %874 = vmatprep.subr.bf16.mxu0 0
        %875 = vmatpush1.bf16.xpose.msra.mxu0 0
        %876 = vmatprep.subr.bf16.mxu0 0
        %877 = vmatpush1.bf16.xpose.msra.mxu0 0
        %878 = vmatprep.subr.bf16.mxu0 0
        %879 = vmatpush1.bf16.xpose.msra.mxu0 0
        %880 = vmatprep.mubr.bf16.mxu0 0
        %881 = vmatmul.mubr.bf16.gmra.mrb[0].mxu0 %v843
        %v882 = vpop.f32.mrb[0].mxu0
        %v883 = vadd.f32 %v836, %v882
        %v884 = vpop.f32.mrb[0].mxu0
        %v885 = vpop.f32.mrb[0].mxu0
        %v886 = vpop.f32.mrb[0].mxu0
        %887 = vdwg.mxu0
        %889 = vrot.lane.b32.xlu0 %v829, 120
        %v890 = vpop.permute.xlu0 %889
        %v892 = vsel %vm841, %v829, 0
        %v895 = vsel %vm841, %v890, 0
        %897 = vmatprep.subr.bf16.mxu0 0
        %898 = vmatpush1.bf16.xpose.msra.mxu0 %v895
        %899 = vmatprep.subr.bf16.mxu0 0
        %900 = vmatpush1.bf16.xpose.msra.mxu0 0
        %901 = vmatprep.subr.bf16.mxu0 0
        %902 = vmatpush1.bf16.xpose.msra.mxu0 0
        %903 = vmatprep.subr.bf16.mxu0 0
        %904 = vmatpush1.bf16.xpose.msra.mxu0 0
        %905 = vmatprep.subr.bf16.mxu0 0
        %906 = vmatpush1.bf16.xpose.msra.mxu0 0
        %907 = vmatprep.subr.bf16.mxu0 0
        %908 = vmatpush1.bf16.xpose.msra.mxu0 0
        %909 = vmatprep.subr.bf16.mxu0 0
        %910 = vmatpush1.bf16.xpose.msra.mxu0 0
        %911 = vmatprep.subr.bf16.mxu0 0
        %912 = vmatpush1.bf16.xpose.msra.mxu0 0
        %913 = vmatprep.subr.bf16.mxu0 0
        %914 = vmatpush1.bf16.xpose.msra.mxu0 0
        %915 = vmatprep.subr.bf16.mxu0 0
        %916 = vmatpush1.bf16.xpose.msra.mxu0 0
        %917 = vmatprep.subr.bf16.mxu0 0
        %918 = vmatpush1.bf16.xpose.msra.mxu0 0
        %919 = vmatprep.subr.bf16.mxu0 0
        %920 = vmatpush1.bf16.xpose.msra.mxu0 0
        %921 = vmatprep.subr.bf16.mxu0 0
        %922 = vmatpush1.bf16.xpose.msra.mxu0 0
        %923 = vmatprep.subr.bf16.mxu0 0
        %924 = vmatpush1.bf16.xpose.msra.mxu0 0
        %925 = vmatprep.subr.bf16.mxu0 0
        %926 = vmatpush1.bf16.xpose.msra.mxu0 0
        %927 = vmatprep.subr.bf16.mxu0 0
        %928 = vmatpush1.bf16.xpose.msra.mxu0 0
        %929 = vmatprep.mubr.bf16.mxu0 0
        %930 = vmatmul.mubr.bf16.gmra.mrb[0].mxu0 %v892
        %v931 = vpop.f32.mrb[0].mxu0
        %v932 = vadd.f32 %v836, %v931
        %v933 = vpop.f32.mrb[0].mxu0
        %v934 = vpop.f32.mrb[0].mxu0
        %v935 = vpop.f32.mrb[0].mxu0
        %936 = vdwg.mxu0
        %938 = vrot.lane.b32.xlu0 %v830, 120
        %v939 = vpop.permute.xlu0 %938
        %v941 = vsel %vm841, %v830, 0
        %v944 = vsel %vm841, %v939, 0
        %946 = vmatprep.subr.bf16.mxu0 0
        %947 = vmatpush1.bf16.xpose.msra.mxu0 %v944
        %948 = vmatprep.subr.bf16.mxu0 0
        %949 = vmatpush1.bf16.xpose.msra.mxu0 0
        %950 = vmatprep.subr.bf16.mxu0 0
        %951 = vmatpush1.bf16.xpose.msra.mxu0 0
        %952 = vmatprep.subr.bf16.mxu0 0
        %953 = vmatpush1.bf16.xpose.msra.mxu0 0
        %954 = vmatprep.subr.bf16.mxu0 0
        %955 = vmatpush1.bf16.xpose.msra.mxu0 0
        %956 = vmatprep.subr.bf16.mxu0 0
        %957 = vmatpush1.bf16.xpose.msra.mxu0 0
        %958 = vmatprep.subr.bf16.mxu0 0
        %959 = vmatpush1.bf16.xpose.msra.mxu0 0
        %960 = vmatprep.subr.bf16.mxu0 0
        %961 = vmatpush1.bf16.xpose.msra.mxu0 0
        %962 = vmatprep.subr.bf16.mxu0 0
        %963 = vmatpush1.bf16.xpose.msra.mxu0 0
        %964 = vmatprep.subr.bf16.mxu0 0
        %965 = vmatpush1.bf16.xpose.msra.mxu0 0
        %966 = vmatprep.subr.bf16.mxu0 0
        %967 = vmatpush1.bf16.xpose.msra.mxu0 0
        %968 = vmatprep.subr.bf16.mxu0 0
        %969 = vmatpush1.bf16.xpose.msra.mxu0 0
        %970 = vmatprep.subr.bf16.mxu0 0
        %971 = vmatpush1.bf16.xpose.msra.mxu0 0
        %972 = vmatprep.subr.bf16.mxu0 0
        %973 = vmatpush1.bf16.xpose.msra.mxu0 0
        %974 = vmatprep.subr.bf16.mxu0 0
        %975 = vmatpush1.bf16.xpose.msra.mxu0 0
        %976 = vmatprep.subr.bf16.mxu0 0
        %977 = vmatpush1.bf16.xpose.msra.mxu0 0
        %978 = vmatprep.mubr.bf16.mxu0 0
        %979 = vmatmul.mubr.bf16.gmra.mrb[0].mxu0 %v941
        %v980 = vpop.f32.mrb[0].mxu0
        %v981 = vadd.f32 %v836, %v980
        %v982 = vpop.f32.mrb[0].mxu0
        %v983 = vpop.f32.mrb[0].mxu0
        %v984 = vpop.f32.mrb[0].mxu0
        %985 = vdwg.mxu0
        %987 = vrot.lane.b32.xlu0 %v831, 120
        %v988 = vpop.permute.xlu0 %987
        %v990 = vsel %vm841, %v831, 0
        %v993 = vsel %vm841, %v988, 0
        %995 = vmatprep.subr.bf16.mxu0 0
        %996 = vmatpush1.bf16.xpose.msra.mxu0 %v993
        %997 = vmatprep.subr.bf16.mxu0 0
        %998 = vmatpush1.bf16.xpose.msra.mxu0 0
        %999 = vmatprep.subr.bf16.mxu0 0
        %1000 = vmatpush1.bf16.xpose.msra.mxu0 0
        %1001 = vmatprep.subr.bf16.mxu0 0
        %1002 = vmatpush1.bf16.xpose.msra.mxu0 0
        %1003 = vmatprep.subr.bf16.mxu0 0
        %1004 = vmatpush1.bf16.xpose.msra.mxu0 0
        %1005 = vmatprep.subr.bf16.mxu0 0
        %1006 = vmatpush1.bf16.xpose.msra.mxu0 0
        %1007 = vmatprep.subr.bf16.mxu0 0
        %1008 = vmatpush1.bf16.xpose.msra.mxu0 0
        %1009 = vmatprep.subr.bf16.mxu0 0
        %1010 = vmatpush1.bf16.xpose.msra.mxu0 0
        %1011 = vmatprep.subr.bf16.mxu0 0
        %1012 = vmatpush1.bf16.xpose.msra.mxu0 0
        %1013 = vmatprep.subr.bf16.mxu0 0
        %1014 = vmatpush1.bf16.xpose.msra.mxu0 0
        %1015 = vmatprep.subr.bf16.mxu0 0
        %1016 = vmatpush1.bf16.xpose.msra.mxu0 0
        %1017 = vmatprep.subr.bf16.mxu0 0
        %1018 = vmatpush1.bf16.xpose.msra.mxu0 0
        %1019 = vmatprep.subr.bf16.mxu0 0
        %1020 = vmatpush1.bf16.xpose.msra.mxu0 0
        %1021 = vmatprep.subr.bf16.mxu0 0
        %1022 = vmatpush1.bf16.xpose.msra.mxu0 0
        %1023 = vmatprep.subr.bf16.mxu0 0
        %1024 = vmatpush1.bf16.xpose.msra.mxu0 0
        %1025 = vmatprep.subr.bf16.mxu0 0
        %1026 = vmatpush1.bf16.xpose.msra.mxu0 0
        %1027 = vmatprep.mubr.bf16.mxu0 0
        %1028 = vmatmul.mubr.bf16.gmra.mrb[0].mxu0 %v990
        %v1029 = vpop.f32.mrb[0].mxu0
        %v1030 = vadd.f32 %v836, %v1029
        %v1031 = vpop.f32.mrb[0].mxu0
        %v1032 = vpop.f32.mrb[0].mxu0
        %v1033 = vpop.f32.mrb[0].mxu0
        %1034 = vdwg.mxu0
        %v1035 = vsel %vm841, %v883, -inf
        %1036 = vmax.xlane.f32.xlu0 %v1035
        %v1037 = vpop.xlane.xlu0 %1036
        %v1038 = vsel %vm841, %v932, -inf
        %1039 = vmax.xlane.f32.xlu0 %v1038
        %v1040 = vpop.xlane.xlu0 %1039
        %v1041 = vsel %vm841, %v981, -inf
        %1042 = vmax.xlane.f32.xlu0 %v1041
        %v1043 = vpop.xlane.xlu0 %1042
        %v1044 = vsel %vm841, %v1030, -inf
        %1045 = vmax.xlane.f32.xlu0 %v1044
        %v1046 = vpop.xlane.xlu0 %1045
        %v1047 = vsub.f32 %v883, %v1037
        %v1048 = vsub.f32 %v932, %v1040
        %v1049 = vsub.f32 %v981, %v1043
        %v1050 = vsub.f32 %v1030, %v1046
        %v1051 = vmul.f32 %v1047, 1.442695
        %v1052 = vpow.pop %v1051
        %v1053 = vmul.f32 %v1048, 1.442695
        %v1054 = vpow.pop %v1053
        %v1055 = vmul.f32 %v1049, 1.442695
        %v1056 = vpow.pop %v1055
        %v1057 = vmul.f32 %v1050, 1.442695
        %v1058 = vpow.pop %v1057
        %v1059 = vsel %vm841, %v1052, 0.0
        %1060 = vadd.xlane.f32.xlu0 %v1059
        %v1061 = vpop.xlane.xlu0 %1060
        %v1062 = vsel %vm841, %v1054, 0.0
        %1063 = vadd.xlane.f32.xlu0 %v1062
        %v1064 = vpop.xlane.xlu0 %1063
        %v1065 = vsel %vm841, %v1056, 0.0
        %1066 = vadd.xlane.f32.xlu0 %v1065
        %v1067 = vpop.xlane.xlu0 %1066
        %v1068 = vsel %vm841, %v1058, 0.0
        %1069 = vadd.xlane.f32.xlu0 %v1068
        %v1070 = vpop.xlane.xlu0 %1069
        %v1071 = vrcp.pop %v1061
        %v1072 = vrcp.pop %v1064
        %v1073 = vrcp.pop %v1067
        %v1074 = vrcp.pop %v1070
        %v1075 = vmul.f32 %v1052, %v1071
        %v1076 = vmul.f32 %v1054, %v1072
        %v1077 = vmul.f32 %v1056, %v1073
        %v1078 = vmul.f32 %v1058, %v1074
        %v1079 = vpack.c.bf16 %v1075, %v1075
        %v1080 = vpack.c.bf16 %v1076, %v1076
        %v1081 = vpack.c.bf16 %v1077, %v1077
        %v1082 = vpack.c.bf16 %v1078, %v1078
        %1083 = vrot.lane.b32.xlu0 %v828, 112
        %v1084 = vpop.permute.xlu0 %1083
        %v1086 = vsel %vm841, %v1079, 0
        %vm1088 = vcmask 1043456
        %v1090 = vsel %vm1088, %v1084, 0
        %1092 = vmatprep.subr.bf16.mxu0 0
        %1093 = vmatpush1.bf16.msra.mxu0 %v1090
        %1094 = vmatprep.subr.bf16.mxu0 0
        %1095 = vmatpush1.bf16.msra.mxu0 0
        %1096 = vmatprep.subr.bf16.mxu0 0
        %1097 = vmatpush1.bf16.msra.mxu0 0
        %1098 = vmatprep.subr.bf16.mxu0 0
        %1099 = vmatpush1.bf16.msra.mxu0 0
        %1100 = vmatprep.subr.bf16.mxu0 0
        %1101 = vmatpush1.bf16.msra.mxu0 0
        %1102 = vmatprep.subr.bf16.mxu0 0
        %1103 = vmatpush1.bf16.msra.mxu0 0
        %1104 = vmatprep.subr.bf16.mxu0 0
        %1105 = vmatpush1.bf16.msra.mxu0 0
        %1106 = vmatprep.subr.bf16.mxu0 0
        %1107 = vmatpush1.bf16.msra.mxu0 0
        %1108 = vmatprep.subr.bf16.mxu0 0
        %1109 = vmatpush1.bf16.msra.mxu0 0
        %1110 = vmatprep.subr.bf16.mxu0 0
        %1111 = vmatpush1.bf16.msra.mxu0 0
        %1112 = vmatprep.subr.bf16.mxu0 0
        %1113 = vmatpush1.bf16.msra.mxu0 0
        %1114 = vmatprep.subr.bf16.mxu0 0
        %1115 = vmatpush1.bf16.msra.mxu0 0
        %1116 = vmatprep.subr.bf16.mxu0 0
        %1117 = vmatpush1.bf16.msra.mxu0 0
        %1118 = vmatprep.subr.bf16.mxu0 0
        %1119 = vmatpush1.bf16.msra.mxu0 0
        %1120 = vmatprep.subr.bf16.mxu0 0
        %1121 = vmatpush1.bf16.msra.mxu0 0
        %1122 = vmatprep.subr.bf16.mxu0 0
        %1123 = vmatpush1.bf16.msra.mxu0 0
        %1124 = vmatprep.mubr.bf16.mxu0 0
        %1125 = vmatmul.mubr.bf16.gmra.mrb[0].mxu0 %v1086
        %v1126 = vpop.f32.mrb[0].mxu0
        %v1127 = vadd.f32 0.0, %v1126
        %v1128 = vpop.f32.mrb[0].mxu0
        %v1129 = vpop.f32.mrb[0].mxu0
        %v1130 = vpop.f32.mrb[0].mxu0
        %1131 = vdwg.mxu0
        %1132 = vrot.lane.b32.xlu0 %v829, 112
        %v1133 = vpop.permute.xlu0 %1132
        %v1135 = vsel %vm841, %v1080, 0
        %v1138 = vsel %vm1088, %v1133, 0
        %1140 = vmatprep.subr.bf16.mxu0 0
        %1141 = vmatpush1.bf16.msra.mxu0 %v1138
        %1142 = vmatprep.subr.bf16.mxu0 0
        %1143 = vmatpush1.bf16.msra.mxu0 0
        %1144 = vmatprep.subr.bf16.mxu0 0
        %1145 = vmatpush1.bf16.msra.mxu0 0
        %1146 = vmatprep.subr.bf16.mxu0 0
        %1147 = vmatpush1.bf16.msra.mxu0 0
        %1148 = vmatprep.subr.bf16.mxu0 0
        %1149 = vmatpush1.bf16.msra.mxu0 0
        %1150 = vmatprep.subr.bf16.mxu0 0
        %1151 = vmatpush1.bf16.msra.mxu0 0
        %1152 = vmatprep.subr.bf16.mxu0 0
        %1153 = vmatpush1.bf16.msra.mxu0 0
        %1154 = vmatprep.subr.bf16.mxu0 0
        %1155 = vmatpush1.bf16.msra.mxu0 0
        %1156 = vmatprep.subr.bf16.mxu0 0
        %1157 = vmatpush1.bf16.msra.mxu0 0
        %1158 = vmatprep.subr.bf16.mxu0 0
        %1159 = vmatpush1.bf16.msra.mxu0 0
        %1160 = vmatprep.subr.bf16.mxu0 0
        %1161 = vmatpush1.bf16.msra.mxu0 0
        %1162 = vmatprep.subr.bf16.mxu0 0
        %1163 = vmatpush1.bf16.msra.mxu0 0
        %1164 = vmatprep.subr.bf16.mxu0 0
        %1165 = vmatpush1.bf16.msra.mxu0 0
        %1166 = vmatprep.subr.bf16.mxu0 0
        %1167 = vmatpush1.bf16.msra.mxu0 0
        %1168 = vmatprep.subr.bf16.mxu0 0
        %1169 = vmatpush1.bf16.msra.mxu0 0
        %1170 = vmatprep.subr.bf16.mxu0 0
        %1171 = vmatpush1.bf16.msra.mxu0 0
        %1172 = vmatprep.mubr.bf16.mxu0 0
        %1173 = vmatmul.mubr.bf16.gmra.mrb[0].mxu0 %v1135
        %v1174 = vpop.f32.mrb[0].mxu0
        %v1175 = vadd.f32 0.0, %v1174
        %v1176 = vpop.f32.mrb[0].mxu0
        %v1177 = vpop.f32.mrb[0].mxu0
        %v1178 = vpop.f32.mrb[0].mxu0
        %1179 = vdwg.mxu0
        %1180 = vrot.lane.b32.xlu0 %v830, 112
        %v1181 = vpop.permute.xlu0 %1180
        %v1183 = vsel %vm841, %v1081, 0
        %v1186 = vsel %vm1088, %v1181, 0
        %1188 = vmatprep.subr.bf16.mxu0 0
        %1189 = vmatpush1.bf16.msra.mxu0 %v1186
        %1190 = vmatprep.subr.bf16.mxu0 0
        %1191 = vmatpush1.bf16.msra.mxu0 0
        %1192 = vmatprep.subr.bf16.mxu0 0
        %1193 = vmatpush1.bf16.msra.mxu0 0
        %1194 = vmatprep.subr.bf16.mxu0 0
        %1195 = vmatpush1.bf16.msra.mxu0 0
        %1196 = vmatprep.subr.bf16.mxu0 0
        %1197 = vmatpush1.bf16.msra.mxu0 0
        %1198 = vmatprep.subr.bf16.mxu0 0
        %1199 = vmatpush1.bf16.msra.mxu0 0
        %1200 = vmatprep.subr.bf16.mxu0 0
        %1201 = vmatpush1.bf16.msra.mxu0 0
        %1202 = vmatprep.subr.bf16.mxu0 0
        %1203 = vmatpush1.bf16.msra.mxu0 0
        %1204 = vmatprep.subr.bf16.mxu0 0
        %1205 = vmatpush1.bf16.msra.mxu0 0
        %1206 = vmatprep.subr.bf16.mxu0 0
        %1207 = vmatpush1.bf16.msra.mxu0 0
        %1208 = vmatprep.subr.bf16.mxu0 0
        %1209 = vmatpush1.bf16.msra.mxu0 0
        %1210 = vmatprep.subr.bf16.mxu0 0
        %1211 = vmatpush1.bf16.msra.mxu0 0
        %1212 = vmatprep.subr.bf16.mxu0 0
        %1213 = vmatpush1.bf16.msra.mxu0 0
        %1214 = vmatprep.subr.bf16.mxu0 0
        %1215 = vmatpush1.bf16.msra.mxu0 0
        %1216 = vmatprep.subr.bf16.mxu0 0
        %1217 = vmatpush1.bf16.msra.mxu0 0
        %1218 = vmatprep.subr.bf16.mxu0 0
        %1219 = vmatpush1.bf16.msra.mxu0 0
        %1220 = vmatprep.mubr.bf16.mxu0 0
        %1221 = vmatmul.mubr.bf16.gmra.mrb[0].mxu0 %v1183
        %v1222 = vpop.f32.mrb[0].mxu0
        %v1223 = vadd.f32 0.0, %v1222
        %v1224 = vpop.f32.mrb[0].mxu0
        %v1225 = vpop.f32.mrb[0].mxu0
        %v1226 = vpop.f32.mrb[0].mxu0
        %1227 = vdwg.mxu0
        %1228 = vrot.lane.b32.xlu0 %v831, 112
        %v1229 = vpop.permute.xlu0 %1228
        %v1231 = vsel %vm841, %v1082, 0
        %v1234 = vsel %vm1088, %v1229, 0
        %1236 = vmatprep.subr.bf16.mxu0 0
        %1237 = vmatpush1.bf16.msra.mxu0 %v1234
        %1238 = vmatprep.subr.bf16.mxu0 0
        %1239 = vmatpush1.bf16.msra.mxu0 0
        %1240 = vmatprep.subr.bf16.mxu0 0
        %1241 = vmatpush1.bf16.msra.mxu0 0
        %1242 = vmatprep.subr.bf16.mxu0 0
        %1243 = vmatpush1.bf16.msra.mxu0 0
        %1244 = vmatprep.subr.bf16.mxu0 0
        %1245 = vmatpush1.bf16.msra.mxu0 0
        %1246 = vmatprep.subr.bf16.mxu0 0
        %1247 = vmatpush1.bf16.msra.mxu0 0
        %1248 = vmatprep.subr.bf16.mxu0 0
        %1249 = vmatpush1.bf16.msra.mxu0 0
        %1250 = vmatprep.subr.bf16.mxu0 0
        %1251 = vmatpush1.bf16.msra.mxu0 0
        %1252 = vmatprep.subr.bf16.mxu0 0
        %1253 = vmatpush1.bf16.msra.mxu0 0
        %1254 = vmatprep.subr.bf16.mxu0 0
        %1255 = vmatpush1.bf16.msra.mxu0 0
        %1256 = vmatprep.subr.bf16.mxu0 0
        %1257 = vmatpush1.bf16.msra.mxu0 0
        %1258 = vmatprep.subr.bf16.mxu0 0
        %1259 = vmatpush1.bf16.msra.mxu0 0
        %1260 = vmatprep.subr.bf16.mxu0 0
        %1261 = vmatpush1.bf16.msra.mxu0 0
        %1262 = vmatprep.subr.bf16.mxu0 0
        %1263 = vmatpush1.bf16.msra.mxu0 0
        %1264 = vmatprep.subr.bf16.mxu0 0
        %1265 = vmatpush1.bf16.msra.mxu0 0
        %1266 = vmatprep.subr.bf16.mxu0 0
        %1267 = vmatpush1.bf16.msra.mxu0 0
        %1268 = vmatprep.mubr.bf16.mxu0 0
        %1269 = vmatmul.mubr.bf16.gmra.mrb[0].mxu0 %v1231
        %v1270 = vpop.f32.mrb[0].mxu0
        %v1271 = vadd.f32 0.0, %v1270
        %v1272 = vpop.f32.mrb[0].mxu0
        %v1273 = vpop.f32.mrb[0].mxu0
        %v1274 = vpop.f32.mrb[0].mxu0
        %1275 = vdwg.mxu0
        %v1276 = vpack.c.bf16 %v1127, %v1127
        %v1277 = vpack.c.bf16 %v1175, %v1175
        %v1278 = vpack.c.bf16 %v1223, %v1223
        %v1279 = vpack.c.bf16 %v1271, %v1271
        %v1280 = vld [vmem:[%s518] sm:$0xf]
        %v1281 = vld [vmem:[%s518 + $0x4] sm:$0xf]
        %v1282 = vld [vmem:[%s518 + $0x8] sm:$0xf]
        %v1283 = vld [vmem:[%s518 + $0xc] sm:$0xf]
        %v1285 = vsel %vm841, %v1276, 0
        %v1288 = vsel %vm1088, %v1280, 0
        %1290 = vmatprep.subr.bf16.mxu0 0
        %1291 = vmatpush1.bf16.msra.mxu0 %v1288
        %1292 = vmatprep.subr.bf16.mxu0 0
        %1293 = vmatpush1.bf16.msra.mxu0 0
        %1294 = vmatprep.subr.bf16.mxu0 0
        %1295 = vmatpush1.bf16.msra.mxu0 0
        %1296 = vmatprep.subr.bf16.mxu0 0
        %1297 = vmatpush1.bf16.msra.mxu0 0
        %1298 = vmatprep.subr.bf16.mxu0 0
        %1299 = vmatpush1.bf16.msra.mxu0 0
        %1300 = vmatprep.subr.bf16.mxu0 0
        %1301 = vmatpush1.bf16.msra.mxu0 0
        %1302 = vmatprep.subr.bf16.mxu0 0
        %1303 = vmatpush1.bf16.msra.mxu0 0
        %1304 = vmatprep.subr.bf16.mxu0 0
        %1305 = vmatpush1.bf16.msra.mxu0 0
        %1306 = vmatprep.subr.bf16.mxu0 0
        %1307 = vmatpush1.bf16.msra.mxu0 0
        %1308 = vmatprep.subr.bf16.mxu0 0
        %1309 = vmatpush1.bf16.msra.mxu0 0
        %1310 = vmatprep.subr.bf16.mxu0 0
        %1311 = vmatpush1.bf16.msra.mxu0 0
        %1312 = vmatprep.subr.bf16.mxu0 0
        %1313 = vmatpush1.bf16.msra.mxu0 0
        %1314 = vmatprep.subr.bf16.mxu0 0
        %1315 = vmatpush1.bf16.msra.mxu0 0
        %1316 = vmatprep.subr.bf16.mxu0 0
        %1317 = vmatpush1.bf16.msra.mxu0 0
        %1318 = vmatprep.subr.bf16.mxu0 0
        %1319 = vmatpush1.bf16.msra.mxu0 0
        %1320 = vmatprep.subr.bf16.mxu0 0
        %1321 = vmatpush1.bf16.msra.mxu0 0
        %1322 = vmatprep.mubr.bf16.mxu0 0
        %1323 = vmatmul.mubr.bf16.gmra.mrb[0].mxu0 %v1285
        %v1324 = vpop.f32.mrb[0].mxu0
        %v1325 = vadd.f32 0.0, %v1324
        %v1326 = vpop.f32.mrb[0].mxu0
        %v1327 = vpop.f32.mrb[0].mxu0
        %v1328 = vpop.f32.mrb[0].mxu0
        %1329 = vdwg.mxu0
        %v1331 = vsel %vm841, %v1277, 0
        %v1334 = vsel %vm1088, %v1281, 0
        %1336 = vmatprep.subr.bf16.mxu0 0
        %1337 = vmatpush1.bf16.msra.mxu0 %v1334
        %1338 = vmatprep.subr.bf16.mxu0 0
        %1339 = vmatpush1.bf16.msra.mxu0 0
        %1340 = vmatprep.subr.bf16.mxu0 0
        %1341 = vmatpush1.bf16.msra.mxu0 0
        %1342 = vmatprep.subr.bf16.mxu0 0
        %1343 = vmatpush1.bf16.msra.mxu0 0
        %1344 = vmatprep.subr.bf16.mxu0 0
        %1345 = vmatpush1.bf16.msra.mxu0 0
        %1346 = vmatprep.subr.bf16.mxu0 0
        %1347 = vmatpush1.bf16.msra.mxu0 0
        %1348 = vmatprep.subr.bf16.mxu0 0
        %1349 = vmatpush1.bf16.msra.mxu0 0
        %1350 = vmatprep.subr.bf16.mxu0 0
        %1351 = vmatpush1.bf16.msra.mxu0 0
        %1352 = vmatprep.subr.bf16.mxu0 0
        %1353 = vmatpush1.bf16.msra.mxu0 0
        %1354 = vmatprep.subr.bf16.mxu0 0
        %1355 = vmatpush1.bf16.msra.mxu0 0
        %1356 = vmatprep.subr.bf16.mxu0 0
        %1357 = vmatpush1.bf16.msra.mxu0 0
        %1358 = vmatprep.subr.bf16.mxu0 0
        %1359 = vmatpush1.bf16.msra.mxu0 0
        %1360 = vmatprep.subr.bf16.mxu0 0
        %1361 = vmatpush1.bf16.msra.mxu0 0
        %1362 = vmatprep.subr.bf16.mxu0 0
        %1363 = vmatpush1.bf16.msra.mxu0 0
        %1364 = vmatprep.subr.bf16.mxu0 0
        %1365 = vmatpush1.bf16.msra.mxu0 0
        %1366 = vmatprep.subr.bf16.mxu0 0
        %1367 = vmatpush1.bf16.msra.mxu0 0
        %1368 = vmatprep.mubr.bf16.mxu0 0
        %1369 = vmatmul.mubr.bf16.gmra.mrb[0].mxu0 %v1331
        %v1370 = vpop.f32.mrb[0].mxu0
        %v1371 = vadd.f32 0.0, %v1370
        %v1372 = vpop.f32.mrb[0].mxu0
        %v1373 = vpop.f32.mrb[0].mxu0
        %v1374 = vpop.f32.mrb[0].mxu0
        %1375 = vdwg.mxu0
        %v1377 = vsel %vm841, %v1278, 0
        %v1380 = vsel %vm1088, %v1282, 0
        %1382 = vmatprep.subr.bf16.mxu0 0
        %1383 = vmatpush1.bf16.msra.mxu0 %v1380
        %1384 = vmatprep.subr.bf16.mxu0 0
        %1385 = vmatpush1.bf16.msra.mxu0 0
        %1386 = vmatprep.subr.bf16.mxu0 0
        %1387 = vmatpush1.bf16.msra.mxu0 0
        %1388 = vmatprep.subr.bf16.mxu0 0
        %1389 = vmatpush1.bf16.msra.mxu0 0
        %1390 = vmatprep.subr.bf16.mxu0 0
        %1391 = vmatpush1.bf16.msra.mxu0 0
        %1392 = vmatprep.subr.bf16.mxu0 0
        %1393 = vmatpush1.bf16.msra.mxu0 0
        %1394 = vmatprep.subr.bf16.mxu0 0
        %1395 = vmatpush1.bf16.msra.mxu0 0
        %1396 = vmatprep.subr.bf16.mxu0 0
        %1397 = vmatpush1.bf16.msra.mxu0 0
        %1398 = vmatprep.subr.bf16.mxu0 0
        %1399 = vmatpush1.bf16.msra.mxu0 0
        %1400 = vmatprep.subr.bf16.mxu0 0
        %1401 = vmatpush1.bf16.msra.mxu0 0
        %1402 = vmatprep.subr.bf16.mxu0 0
        %1403 = vmatpush1.bf16.msra.mxu0 0
        %1404 = vmatprep.subr.bf16.mxu0 0
        %1405 = vmatpush1.bf16.msra.mxu0 0
        %1406 = vmatprep.subr.bf16.mxu0 0
        %1407 = vmatpush1.bf16.msra.mxu0 0
        %1408 = vmatprep.subr.bf16.mxu0 0
        %1409 = vmatpush1.bf16.msra.mxu0 0
        %1410 = vmatprep.subr.bf16.mxu0 0
        %1411 = vmatpush1.bf16.msra.mxu0 0
        %1412 = vmatprep.subr.bf16.mxu0 0
        %1413 = vmatpush1.bf16.msra.mxu0 0
        %1414 = vmatprep.mubr.bf16.mxu0 0
        %1415 = vmatmul.mubr.bf16.gmra.mrb[0].mxu0 %v1377
        %v1416 = vpop.f32.mrb[0].mxu0
        %v1417 = vadd.f32 0.0, %v1416
        %v1418 = vpop.f32.mrb[0].mxu0
        %v1419 = vpop.f32.mrb[0].mxu0
        %v1420 = vpop.f32.mrb[0].mxu0
        %1421 = vdwg.mxu0
        %v1423 = vsel %vm841, %v1279, 0
        %v1426 = vsel %vm1088, %v1283, 0
        %1428 = vmatprep.subr.bf16.mxu0 0
        %1429 = vmatpush1.bf16.msra.mxu0 %v1426
        %1430 = vmatprep.subr.bf16.mxu0 0
        %1431 = vmatpush1.bf16.msra.mxu0 0
        %1432 = vmatprep.subr.bf16.mxu0 0
        %1433 = vmatpush1.bf16.msra.mxu0 0
        %1434 = vmatprep.subr.bf16.mxu0 0
        %1435 = vmatpush1.bf16.msra.mxu0 0
        %1436 = vmatprep.subr.bf16.mxu0 0
        %1437 = vmatpush1.bf16.msra.mxu0 0
        %1438 = vmatprep.subr.bf16.mxu0 0
        %1439 = vmatpush1.bf16.msra.mxu0 0
        %1440 = vmatprep.subr.bf16.mxu0 0
        %1441 = vmatpush1.bf16.msra.mxu0 0
        %1442 = vmatprep.subr.bf16.mxu0 0
        %1443 = vmatpush1.bf16.msra.mxu0 0
        %1444 = vmatprep.subr.bf16.mxu0 0
        %1445 = vmatpush1.bf16.msra.mxu0 0
        %1446 = vmatprep.subr.bf16.mxu0 0
        %1447 = vmatpush1.bf16.msra.mxu0 0
        %1448 = vmatprep.subr.bf16.mxu0 0
        %1449 = vmatpush1.bf16.msra.mxu0 0
        %1450 = vmatprep.subr.bf16.mxu0 0
        %1451 = vmatpush1.bf16.msra.mxu0 0
        %1452 = vmatprep.subr.bf16.mxu0 0
        %1453 = vmatpush1.bf16.msra.mxu0 0
        %1454 = vmatprep.subr.bf16.mxu0 0
        %1455 = vmatpush1.bf16.msra.mxu0 0
        %1456 = vmatprep.subr.bf16.mxu0 0
        %1457 = vmatpush1.bf16.msra.mxu0 0
        %1458 = vmatprep.subr.bf16.mxu0 0
        %1459 = vmatpush1.bf16.msra.mxu0 0
        %1460 = vmatprep.mubr.bf16.mxu0 0
        %1461 = vmatmul.mubr.bf16.gmra.mrb[0].mxu0 %v1423
        %v1462 = vpop.f32.mrb[0].mxu0
        %v1463 = vadd.f32 0.0, %v1462
        %v1464 = vpop.f32.mrb[0].mxu0
        %v1465 = vpop.f32.mrb[0].mxu0
        %v1466 = vpop.f32.mrb[0].mxu0
        %1467 = vdwg.mxu0
        %v1468 = vsel %vm547, %v1325, 0.0
        %v1469 = vsel %vm547, %v1371, 0.0
        %v1470 = vadd.f32 %v1468, %v1469
        %v1471 = vsel %vm547, %v1417, 0.0
        %v1472 = vadd.f32 %v1470, %v1471
        %v1473 = vsel %vm547, %v1463, 0.0
        %v1474 = vadd.f32 %v1472, %v1473
        %v1475 = vlaneseq
        %v1476 = vshrl.u32 %v1475, 7
        %v1477 = vsub.s32 2, %v1476
        %v1478 = vrot.slane %v546, %v1477
        %v1479 = vadd.f32 %v1474, %v1478
        %v1480 = vadd.f32 %v544, %v1479
        %v1481 = vsel %vm547, %v1480, 0.0
        %1482 = vadd.xlane.f32.xlu0 %v1481
        %v1483 = vpop.xlane.xlu0 %1482
        %v1484 = vmul.f32 %v1483, %v551
        %v1485 = vsub.f32 %v1480, %v1484
        %v1486 = vmul.f32 %v1485, %v1485
        %v1487 = vsel %vm547, %v1486, 0.0
        %1488 = vadd.xlane.f32.xlu0 %v1487
        %v1489 = vpop.xlane.xlu0 %1488
        %v1490 = vmul.f32 %v1489, %v551
        %v1491 = vadd.f32 %v1490, 1e-05
        %v1492 = vrsqrt.pop %v1491
        %v1493 = vmul.f32 %v1485, %v1492
        %v1494 = vlaneseq
        %v1495 = vshrl.u32 %v1494, 7
        %v1496 = vsub.s32 3, %v1495
        %v1497 = vrot.slane %v546, %v1496
        %v1498 = vmul.f32 %v1493, %v1497
        %v1499 = vlaneseq
        %v1500 = vshrl.u32 %v1499, 7
        %v1501 = vsub.s32 4, %v1500
        %v1502 = vrot.slane %v546, %v1501
        %v1503 = vadd.f32 %v1498, %v1502
        %v1504 = vpack.c.bf16 %v1503, %v1503
        %v1505 = vld [vmem:[%s523] sm:$0xf]
        %v1506 = vld [vmem:[%s523 + $0x4] sm:$0xf]
        %v1507 = vld [vmem:[%s523 + $0x8] sm:$0xf]
        %v1508 = vld [vmem:[%s523 + $0xc] sm:$0xf]
        %v1509 = vld [vmem:[%s526] sm:$0x1]
        %v1511 = vlaneseq
        %v1512 = vshrl.u32 %v1511, 7
        %v1513 = vsub.s32 0, %v1512
        %v1514 = vrot.slane %v1509, %v1513
        %v1520 = vunpack.c.l.b16 %v1505
        %v1521 = vunpack.c.l.b16 %v1506
        %v1522 = vunpack.c.l.b16 %v1507
        %v1523 = vunpack.c.l.b16 %v1508
        %v1524 = vpack.c.b16 %v1521, %v1520
        %v1525 = vpack.c.b16 %v1523, %v1522
        %v1529 = vsel %vm547, %v1504, 0
        %1531 = vmatprep.subr.bf16.mxu0 0
        %1532 = vmatpush1.bf16.msra.mxu0 %v1524
        %1533 = vmatprep.subr.bf16.mxu0 0
        %1534 = vmatpush1.bf16.msra.mxu0 %v1525
        %1535 = vmatprep.subr.bf16.mxu0 0
        %1536 = vmatpush1.bf16.msra.mxu0 0
        %1537 = vmatprep.subr.bf16.mxu0 0
        %1538 = vmatpush1.bf16.msra.mxu0 0
        %1539 = vmatprep.subr.bf16.mxu0 0
        %1540 = vmatpush1.bf16.msra.mxu0 0
        %1541 = vmatprep.subr.bf16.mxu0 0
        %1542 = vmatpush1.bf16.msra.mxu0 0
        %1543 = vmatprep.subr.bf16.mxu0 0
        %1544 = vmatpush1.bf16.msra.mxu0 0
        %1545 = vmatprep.subr.bf16.mxu0 0
        %1546 = vmatpush1.bf16.msra.mxu0 0
        %1547 = vmatprep.subr.bf16.mxu0 0
        %1548 = vmatpush1.bf16.msra.mxu0 0
        %1549 = vmatprep.subr.bf16.mxu0 0
        %1550 = vmatpush1.bf16.msra.mxu0 0
        %1551 = vmatprep.subr.bf16.mxu0 0
        %1552 = vmatpush1.bf16.msra.mxu0 0
        %1553 = vmatprep.subr.bf16.mxu0 0
        %1554 = vmatpush1.bf16.msra.mxu0 0
        %1555 = vmatprep.subr.bf16.mxu0 0
        %1556 = vmatpush1.bf16.msra.mxu0 0
        %1557 = vmatprep.subr.bf16.mxu0 0
        %1558 = vmatpush1.bf16.msra.mxu0 0
        %1559 = vmatprep.subr.bf16.mxu0 0
        %1560 = vmatpush1.bf16.msra.mxu0 0
        %1561 = vmatprep.subr.bf16.mxu0 0
        %1562 = vmatpush1.bf16.msra.mxu0 0
        %1563 = vmatprep.mubr.bf16.mxu0 0
        %1564 = vmatmul.mubr.bf16.gmra.mrb[0].mxu0 %v1529
        %v1565 = vpop.f32.mrb[0].mxu0
        %v1566 = vadd.f32 %v1514, %v1565
        %v1567 = vpop.f32.mrb[0].mxu0
        %v1568 = vpop.f32.mrb[0].mxu0
        %v1569 = vpop.f32.mrb[0].mxu0
        %1570 = vdwg.mxu0
        %v1571 = vmax.f32 %v1566, 0.0
        %v1572 = vpack.c.bf16 %v1571, %v1571
        %v1573 = vld [vmem:[%s531] sm:$0xf]
        %v1574 = vld [vmem:[%s531 + $0x4] sm:$0xf]
        %v1575 = vld [vmem:[%s531 + $0x8] sm:$0xf]
        %v1576 = vld [vmem:[%s531 + $0xc] sm:$0xf]
        %v1577 = vld [vmem:[%s531 + $0x10] sm:$0xf]
        %v1578 = vld [vmem:[%s531 + $0x14] sm:$0xf]
        %v1579 = vld [vmem:[%s531 + $0x18] sm:$0xf]
        %v1580 = vld [vmem:[%s531 + $0x1c] sm:$0xf]
        %v1581 = vlaneseq
        %v1582 = vshrl.u32 %v1581, 7
        %v1583 = vsub.s32 5, %v1582
        %v1584 = vrot.slane %v546, %v1583
        %v1593 = vunpack.c.l.b16 %v1573
        %v1594 = vunpack.c.l.b16 %v1574
        %v1595 = vunpack.c.l.b16 %v1575
        %v1596 = vunpack.c.l.b16 %v1576
        %v1597 = vunpack.c.l.b16 %v1577
        %v1598 = vunpack.c.l.b16 %v1578
        %v1599 = vunpack.c.l.b16 %v1579
        %v1600 = vunpack.c.l.b16 %v1580
        %v1601 = vpack.c.b16 %v1594, %v1593
        %v1602 = vpack.c.b16 %v1596, %v1595
        %v1603 = vpack.c.b16 %v1598, %v1597
        %v1604 = vpack.c.b16 %v1600, %v1599
        %vm1609 = vcmask 523264
        %v1611 = vsel %vm1609, %v1572, 0
        %1613 = vmatprep.subr.bf16.mxu0 0
        %1614 = vmatpush1.bf16.msra.mxu0 %v1601
        %1615 = vmatprep.subr.bf16.mxu0 0
        %1616 = vmatpush1.bf16.msra.mxu0 %v1602
        %1617 = vmatprep.subr.bf16.mxu0 0
        %1618 = vmatpush1.bf16.msra.mxu0 %v1603
        %1619 = vmatprep.subr.bf16.mxu0 0
        %1620 = vmatpush1.bf16.msra.mxu0 %v1604
        %1621 = vmatprep.subr.bf16.mxu0 0
        %1622 = vmatpush1.bf16.msra.mxu0 0
        %1623 = vmatprep.subr.bf16.mxu0 0
        %1624 = vmatpush1.bf16.msra.mxu0 0
        %1625 = vmatprep.subr.bf16.mxu0 0
        %1626 = vmatpush1.bf16.msra.mxu0 0
        %1627 = vmatprep.subr.bf16.mxu0 0
        %1628 = vmatpush1.bf16.msra.mxu0 0
        %1629 = vmatprep.subr.bf16.mxu0 0
        %1630 = vmatpush1.bf16.msra.mxu0 0
        %1631 = vmatprep.subr.bf16.mxu0 0
        %1632 = vmatpush1.bf16.msra.mxu0 0
        %1633 = vmatprep.subr.bf16.mxu0 0
        %1634 = vmatpush1.bf16.msra.mxu0 0
        %1635 = vmatprep.subr.bf16.mxu0 0
        %1636 = vmatpush1.bf16.msra.mxu0 0
        %1637 = vmatprep.subr.bf16.mxu0 0
        %1638 = vmatpush1.bf16.msra.mxu0 0
        %1639 = vmatprep.subr.bf16.mxu0 0
        %1640 = vmatpush1.bf16.msra.mxu0 0
        %1641 = vmatprep.subr.bf16.mxu0 0
        %1642 = vmatpush1.bf16.msra.mxu0 0
        %1643 = vmatprep.subr.bf16.mxu0 0
        %1644 = vmatpush1.bf16.msra.mxu0 0
        %1645 = vmatprep.mubr.bf16.mxu0 0
        %1646 = vmatmul.mubr.bf16.gmra.mrb[0].mxu0 %v1611
        %v1647 = vpop.f32.mrb[0].mxu0
        %v1648 = vadd.f32 %v1584, %v1647
        %v1649 = vpop.f32.mrb[0].mxu0
        %v1650 = vpop.f32.mrb[0].mxu0
        %v1651 = vpop.f32.mrb[0].mxu0
        %1652 = vdwg.mxu0
        %v1653 = vadd.f32 %v1480, %v1648
        %1654 = vst.msk [vmem:[#allocation2] sm:$0xff] %vm547, %v1653
        %p1655 = scmp.eq.s32.totalorder %s30, 1
        // Predicated region
        $region69: #{tpu_custom_call.1} parent=63 // pred_check
          %p1656 = pneg %p1655
        $region70: #{tpu_custom_call.1} parent=63 // pred_check_branch
          %1658 = sbr.rel (%p1656) target = $region72
        $region71: #{tpu_custom_call.1} parent=63 // pred_region
          %v1659 = vld [vmem:[%s9] sm:$0x1]
          %v1660 = vld [vmem:[%s10] sm:$0x1]
          %v1661 = vsel %vm547, %v1653, 0.0
          %1662 = vadd.xlane.f32.xlu0 %v1661
          %v1663 = vpop.xlane.xlu0 %1662
          %v1664 = vmul.f32 %v1663, %v551
          %v1665 = vsub.f32 %v1653, %v1664
          %v1666 = vmul.f32 %v1665, %v1665
          %v1667 = vsel %vm547, %v1666, 0.0
          %1668 = vadd.xlane.f32.xlu0 %v1667
          %v1669 = vpop.xlane.xlu0 %1668
          %v1670 = vmul.f32 %v1669, %v551
          %v1671 = vadd.f32 %v1670, 1e-05
          %v1672 = vrsqrt.pop %v1671
          %v1673 = vmul.f32 %v1665, %v1672
          %v1675 = vlaneseq
          %v1676 = vshrl.u32 %v1675, 7
          %v1677 = vsub.s32 0, %v1676
          %v1678 = vrot.slane %v1659, %v1677
          %v1680 = vmul.f32 %v1673, %v1678
          %v1682 = vlaneseq
          %v1683 = vshrl.u32 %v1682, 7
          %v1684 = vsub.s32 0, %v1683
          %v1685 = vrot.slane %v1660, %v1684
          %v1687 = vadd.f32 %v1680, %v1685
          %1688 = vst.msk [vmem:[%s497] sm:$0xff] %vm547, %v1687
        $region72: #{tpu_custom_call.1} parent=63 // pred_fallthru
          _
        %s1689 = sand.u32 %s321, 1
        %s1690 = scalar_lea.sflag [#allocation4], %s1689
        %s1691 = sand.u32 %s321, 1
        %s1692 = smul.addr %s1691, 8
        %s1693 = scalar_lea.vmem [#allocation3], %s1692
        // Predicated region
        $region73: #{tpu_custom_call.1} parent=63 // pred_check
          %p1694 = pneg %p331
        $region74: #{tpu_custom_call.1} parent=63 // pred_check_branch
          %1696 = sbr.rel (%p1694) target = $region76
        $region75: #{tpu_custom_call.1} parent=63 // pred_region
          %s1698 = ssub.s32 128, 128
          %1699 = vsyncadd %s1690, %s1698
          %s1700 = smul.addr %s29, 128
          %s1701 = scalar_lea.hbm %s11, %s1700
          %s1703 = sshll.u32 %s1693, 4
          %s1704 = int_to_ptr.vmem [resolvable:$true] %s1703
          %1706 = dma.vmem_to_hbm [thread:$0]  %s1704, 128, %s1701, %s1690
        $region76: #{tpu_custom_call.1} parent=63 // pred_fallthru
          _
      $region64: #{tpu_custom_call.1} parent=5 // pred_fallthru
        _
      %p1707 = scmp.le.s32.totalorder 2, %s20
      // Predicated region
      $region77: #{tpu_custom_call.1} parent=5 // pred_check
        %p1708 = pneg %p1707
      $region78: #{tpu_custom_call.1} parent=5 // pred_check_branch
        %1710 = sbr.rel (%p1708) target = $region80
      $region79: #{tpu_custom_call.1} parent=5 // pred_region
        %s1711 = ssub.s32 %s20, 2
        // Predicated region
        $region81: #{tpu_custom_call.1} parent=79 // pred_check
          %p1712 = pneg %p337
        $region82: #{tpu_custom_call.1} parent=79 // pred_check_branch
          %1714 = sbr.rel (%p1712) target = $region84
        $region83: #{tpu_custom_call.1} parent=79 // pred_region
          %s1715 = sand.u32 %s322, 1
          %s1716 = scalar_lea.sflag [#allocation4], %s1715
          %s1717 = sand.u32 %s322, 1
          %s1718 = smul.addr %s1717, 8
          %s1719 = scalar_lea.vmem [#allocation3], %s1718
          %1720 = dma.done %s1716, 128
        $region84: #{tpu_custom_call.1} parent=79 // pred_fallthru
          _
      $region80: #{tpu_custom_call.1} parent=5 // pred_fallthru
        _
    $region6: #{tpu_custom_call.1} parent=1 // loop_footer
      %s24 = sadd.s32 1, %s20
    $region7: #{tpu_custom_call.1} parent=1 // loop_footer_branch
      %19 = sbr.rel target = $region3
    $region8: #{tpu_custom_call.1} parent=1 // loop_exit
      _
    %1721 = vsyncpa [#allocation4], 1
    %s1722 = scalar_lea.sflag [#allocation4], 1
    %1723 = vsyncpa %s1722, 1

</llo_original>
